<compile_context>
chip_gen: v7x
topology: tpu7x:2x2x1
jax: 0.10.0
libtpu: 0.0.40
codegen_flags: <defaults>
</compile_context>

<pallas_src>
import functools

import jax
import jax.numpy as jnp
from jax import lax
from jax.experimental import pallas as pl
from jax.experimental.pallas import tpu as pltpu

EPS = 1e-5
LANE = 128

_MM_PARAMS = pltpu.CompilerParams(
    dimension_semantics=("parallel", "parallel", "arbitrary"))
_VPU_PARAMS = pltpu.CompilerParams(dimension_semantics=("parallel",))
_ONE_PARAMS = pltpu.CompilerParams(dimension_semantics=("arbitrary",))


# ------------------------------ tiling helpers -------------------------------

def _round_up(v, m):
    return -(-v // m) * m


def _tile_m(m):
    """Row tile for the matmul: 128, or the (multiple-of-8) padded row count."""
    return 128 if m >= 128 else _round_up(m, 8)


def _k_tiling(k):
    """(tk, K_pad) for the reduction axis."""
    kp = _round_up(k, 128)
    if kp % 256 == 0:
        return 256, kp
    return 128, kp


def _row_tile(mp):
    """Row tile for the elementwise (VPU) kernels."""
    for t in (512, 256, 128, 64, 32, 16, 8):
        if mp % t == 0:
            return t
    return mp


def _cpad(c):
    return _round_up(c, LANE)


# ------------------------------- Pallas kernels -------------------------------

def _matmul_stats_kernel(x_ref, w_ref, o_ref, sum_ref, sq_ref, acc_ref):
    """Tiled bf16 matmul with f32 accumulation; emits per-tile BN statistics."""
    k = pl.program_id(2)

    @pl.when(k == 0)
    def _init():
        acc_ref[...] = jnp.zeros_like(acc_ref)

    acc_ref[...] += jnp.dot(x_ref[...], w_ref[...],
                            preferred_element_type=jnp.float32)

    @pl.when(k == pl.num_programs(2) - 1)
    def _finalize():
        acc = acc_ref[...]
        o_ref[...] = acc.astype(o_ref.dtype)
        # Per-(m,n)-tile channel statistics for training-mode BatchNorm.
        sum_ref[0] = jnp.sum(acc, axis=0, keepdims=True)
        sq_ref[0] = jnp.sum(acc * acc, axis=0, keepdims=True)


def _bn_act_kernel(y_ref, sc_ref, sh_ref, o_ref, *, relu):
    """y * scale + shift (f32 math), optional ReLU, bf16 in/out."""
    z = y_ref[...].astype(jnp.float32) * sc_ref[...] + sh_ref[...]
    if relu:
        z = jnp.maximum(z, 0.0)
    o_ref[...] = z.astype(o_ref.dtype)


def _bn_relu_add_relu_kernel(y_ref, sc_ref, sh_ref, skip_ref, o_ref):
    """relu( relu(bn(y)) + skip ) — matches the PyTorch residual_block tail."""
    z = y_ref[...].astype(jnp.float32) * sc_ref[...] + sh_ref[...]
    z = jnp.maximum(z, 0.0) + skip_ref[...].astype(jnp.float32)
    o_ref[...] = jnp.maximum(z, 0.0).astype(o_ref.dtype)


def _fc_kernel(x_ref, w_ref, b_ref, o_ref):
    o_ref[...] = jnp.dot(x_ref[...], w_ref[...],
                         preferred_element_type=jnp.float32) + b_ref[...]


# ------------------------------ Pallas wrappers -------------------------------

def _tiled_matmul_stats(x, w):
    """x:(Mp,Kp) bf16 @ w:(Kp,Np) bf16 -> y:(Mp,Np) bf16 + per-tile stats."""
    mp, kp = x.shape
    kp2, np_ = w.shape
    assert kp == kp2, (kp, kp2)
    tm = _tile_m(mp)
    tk, _ = _k_tiling(kp)
    tn = LANE
    gm, gn, gk = mp // tm, np_ // tn, kp // tk
    return pl.pallas_call(
        _matmul_stats_kernel,
        out_shape=(
            jax.ShapeDtypeStruct((mp, np_), jnp.bfloat16),
            jax.ShapeDtypeStruct((gm, 1, np_), jnp.float32),
            jax.ShapeDtypeStruct((gm, 1, np_), jnp.float32),
        ),
        grid=(gm, gn, gk),
        in_specs=[
            pl.BlockSpec((tm, tk), lambda i, j, k: (i, k)),
            pl.BlockSpec((tk, tn), lambda i, j, k: (k, j)),
        ],
        out_specs=(
            pl.BlockSpec((tm, tn), lambda i, j, k: (i, j)),
            pl.BlockSpec((1, 1, tn), lambda i, j, k: (i, 0, j)),
            pl.BlockSpec((1, 1, tn), lambda i, j, k: (i, 0, j)),
        ),
        scratch_shapes=[pltpu.VMEM((tm, tn), jnp.float32)],
        compiler_params=_MM_PARAMS,
    )(x, w)


def _bn_act(y, scale, shift, relu):
    mp, cp = y.shape
    tr = _row_tile(mp)
    return pl.pallas_call(
        functools.partial(_bn_act_kernel, relu=relu),
        out_shape=jax.ShapeDtypeStruct((mp, cp), jnp.bfloat16),
        grid=(mp // tr,),
        in_specs=[
            pl.BlockSpec((tr, cp), lambda i: (i, 0)),
            pl.BlockSpec((1, cp), lambda i: (0, 0)),
            pl.BlockSpec((1, cp), lambda i: (0, 0)),
        ],
        out_specs=pl.BlockSpec((tr, cp), lambda i: (i, 0)),
        compiler_params=_VPU_PARAMS,
    )(y, scale, shift)


def _bn_relu_add_relu(y, scale, shift, skip):
    mp, cp = y.shape
    tr = _row_tile(mp)
    return pl.pallas_call(
        _bn_relu_add_relu_kernel,
        out_shape=jax.ShapeDtypeStruct((mp, cp), jnp.bfloat16),
        grid=(mp // tr,),
        in_specs=[
            pl.BlockSpec((tr, cp), lambda i: (i, 0)),
            pl.BlockSpec((1, cp), lambda i: (0, 0)),
            pl.BlockSpec((1, cp), lambda i: (0, 0)),
            pl.BlockSpec((tr, cp), lambda i: (i, 0)),
        ],
        out_specs=pl.BlockSpec((tr, cp), lambda i: (i, 0)),
        input_output_aliases={3: 0},   # skip buffer reused for the output
        compiler_params=_VPU_PARAMS,
    )(y, scale, shift, skip)


# ------------------------------ JAX glue ops ----------------------------------

def _im2col(x, kh, kw, stride, pad):
    """x:(N,H,W,C) -> patches (N*OH*OW, kh*kw*C), OH, OW.  bf16 throughout."""
    # TODO(synk): patches are still materialized by XLA (in bf16); fully fusing
    # the patch gather into the matmul needs manual DMA over the padded input.
    n, h, w, c = x.shape
    if pad:
        x = jnp.pad(x, ((0, 0), (pad, pad), (pad, pad), (0, 0)))
    oh = (h + 2 * pad - kh) // stride + 1
    ow = (w + 2 * pad - kw) // stride + 1
    taps = []
    for i in range(kh):
        for j in range(kw):
            taps.append(x[:, i:i + stride * oh:stride, j:j + stride * ow:stride, :])
    p = jnp.stack(taps, axis=3)                      # (N, OH, OW, kh*kw, C)
    return p.reshape(n * oh * ow, kh * kw * c), oh, ow


def _bn_scale_shift(s_sum, s_sq, gamma, beta, m_real):
    """Training-mode BatchNorm: biased variance over m_real samples."""
    s1 = jnp.sum(s_sum, axis=0)[0]
    s2 = jnp.sum(s_sq, axis=0)[0]
    mean = s1 / m_real
    var = jnp.maximum(s2 / m_real - mean * mean, 0.0)
    inv = lax.rsqrt(var + EPS)
    scale = gamma * inv
    shift = beta - mean * scale
    return scale[None, :], shift[None, :]


def _to_2d(x_sp):
    """(N,H,W,C) -> (M_pad, C) with zero row padding to the matmul tile."""
    n, h, w, c = x_sp.shape
    m = n * h * w
    mp = _round_up(m, _tile_m(m))
    a = x_sp.reshape(m, c)
    if mp > m:
        a = jnp.pad(a, ((0, mp - m), (0, 0)))
    return a


@jax.jit
def maxpool_3x3_s2_p1(x):
    # Plain-JAX max pooling (single call in the net; not the hot path).
    n, h, w, c = x.shape
    xp = jnp.pad(x, ((0, 0), (1, 1), (1, 1), (0, 0)), constant_values=-jnp.inf)
    oh = (h + 2 - 3) // 2 + 1
    ow = (w + 2 - 3) // 2 + 1
    out = jnp.full((n, oh, ow, c), -jnp.inf, x.dtype)
    for i in range(3):
        for j in range(3):
            out = jnp.maximum(out, xp[:, i:i + 2 * oh:2, j:j + 2 * ow:2, :])
    return out


# ---------------------------- fused conv + BN ops ------------------------------

def _conv_bn_core(a2d, w_mat, gamma, beta, n, h, w, kh, kw, stride, pad):
    c_in = a2d.shape[1]
    m_in = n * h * w
    x_sp = a2d[:m_in].reshape(n, h, w, c_in)
    patches, _, _ = _im2col(x_sp, kh, kw, stride, pad)
    m, k = patches.shape
    tm = _tile_m(m)
    mp = _round_up(m, tm)
    _, kp = _k_tiling(k)
    patches = jnp.pad(patches, ((0, mp - m), (0, kp - k)))
    assert patches.shape[1] == w_mat.shape[0], (patches.shape, w_mat.shape)
    y, s_sum, s_sq = _tiled_matmul_stats(patches, w_mat)
    scale, shift = _bn_scale_shift(s_sum, s_sq, gamma, beta, float(m))
    return y, scale, shift


@functools.partial(
    jax.jit,
    static_argnames=("n", "h", "w", "kh", "kw", "stride", "pad", "relu"))
def conv_bn(a2d, w_mat, gamma, beta, *, n, h, w, kh, kw, stride, pad, relu):
    """conv (tiled bf16 MXU matmul) -> training-mode BN (-> optional ReLU)."""
    y, scale, shift = _conv_bn_core(a2d, w_mat, gamma, beta,
                                    n, h, w, kh, kw, stride, pad)
    return _bn_act(y, scale, shift, relu)


@functools.partial(
    jax.jit,
    donate_argnums=(4,),
    static_argnames=("n", "h", "w", "kh", "kw", "stride", "pad"))
def conv_bn_add(a2d, w_mat, gamma, beta, skip2d, *, n, h, w, kh, kw, stride, pad):
    """conv -> BN -> ReLU -> (+skip) -> ReLU, residual add fused in the BN kernel."""
    y, scale, shift = _conv_bn_core(a2d, w_mat, gamma, beta,
                                    n, h, w, kh, kw, stride, pad)
    return _bn_relu_add_relu(y, scale, shift, skip2d)


@jax.jit
def fc_forward(xpool, w, b):
    m, kdim = xpool.shape
    ncls = w.shape[0]
    mp = _round_up(m, 8)
    np_ = _round_up(ncls, LANE)
    x = jnp.pad(xpool, ((0, mp - m), (0, 0)))
    wt = jnp.pad(w.T, ((0, 0), (0, np_ - ncls)))
    bp = jnp.pad(b, (0, np_ - ncls)).reshape(1, np_)
    out = pl.pallas_call(
        _fc_kernel,
        out_shape=jax.ShapeDtypeStruct((mp, np_), jnp.float32),
        grid=(1,),
        in_specs=[
            pl.BlockSpec((mp, kdim), lambda i: (0, 0)),
            pl.BlockSpec((kdim, np_), lambda i: (0, 0)),
            pl.BlockSpec((1, np_), lambda i: (0, 0)),
        ],
        out_specs=pl.BlockSpec((mp, np_), lambda i: (0, 0)),
        compiler_params=_ONE_PARAMS,
    )(x, wt, bp)
    return out[:m, :ncls]


# ------------------------------ parameters ------------------------------------

def make_conv_params(key, feed_ch, in_ch, out_ch, ksize):
    """Conv weight pre-laid-out as a padded (K_pad, Cout_pad) bf16 matmul operand.

    feed_ch: channel count of the (channel-padded) activation feeding this conv.
    Conv bias is omitted: it cancels exactly under training-mode BatchNorm.
    """
    fan_in = in_ch * ksize * ksize
    bound = (6.0 / fan_in) ** 0.5                       # kaiming_uniform_
    w = jax.random.uniform(key, (ksize, ksize, in_ch, out_ch),
                           jnp.float32, -bound, bound)
    out_pad = _cpad(out_ch)
    k_real = ksize * ksize * feed_ch
    _, k_pad = _k_tiling(k_real)
    w_full = jnp.zeros((ksize, ksize, feed_ch, out_pad), jnp.float32)
    w_full = w_full.at[:, :, :in_ch, :out_ch].set(w)
    w_mat = w_full.reshape(k_real, out_pad)
    if k_pad > k_real:
        w_mat = jnp.pad(w_mat, ((0, k_pad - k_real), (0, 0)))
    return {
        "w": w_mat.astype(jnp.bfloat16),
        "gamma": jnp.ones((out_pad,), jnp.float32),
        "beta": jnp.zeros((out_pad,), jnp.float32),
    }


def build_resnet34_params(key, num_classes):
    block_cfg = [3, 4, 6, 3]
    chans = [64, 64, 128, 256, 512]
    keys = iter(jax.random.split(key, 64))

    params = {"stem": make_conv_params(next(keys), 3, 3, 64, 7)}

    stages = []
    for s in range(4):
        ic, oc = chans[s], chans[s + 1]
        ic_pad, oc_pad = _cpad(ic), _cpad(oc)
        stage = []
        blk = {
            "downsample": ic != oc,
            "conv_1": make_conv_params(next(keys), ic_pad, ic, oc, 3),
            "conv_2": make_conv_params(next(keys), oc_pad, oc, oc, 3),
        }
        if blk["downsample"]:
            blk["project"] = make_conv_params(next(keys), ic_pad, ic, oc, 1)
        stage.append(blk)
        for _ in range(block_cfg[s] - 1):
            stage.append({
                "downsample": False,
                "conv_1": make_conv_params(next(keys), oc_pad, oc, oc, 3),
                "conv_2": make_conv_params(next(keys), oc_pad, oc, oc, 3),
            })
        stages.append(stage)
    params["stages"] = stages

    fan_in = chans[-1]
    bw = (6.0 / fan_in) ** 0.5
    params["fc_w"] = jax.random.uniform(
        next(keys), (num_classes, fan_in), jnp.float32, -bw, bw)
    bb = 1.0 / fan_in ** 0.5
    params["fc_b"] = jax.random.uniform(
        next(keys), (num_classes,), jnp.float32, -bb, bb)
    return params


# --------------------------------- model --------------------------------------

def residual_block_fwd(a, shape, blk):
    n, h, w = shape
    stride = 2 if blk["downsample"] else 1
    oh = (h + 2 - 3) // stride + 1
    ow = (w + 2 - 3) // stride + 1

    f = conv_bn(a, blk["conv_1"]["w"], blk["conv_1"]["gamma"],
                blk["conv_1"]["beta"],
                n=n, h=h, w=w, kh=3, kw=3, stride=stride, pad=1, relu=True)
    if blk["downsample"]:
        skip = conv_bn(a, blk["project"]["w"], blk["project"]["gamma"],
                       blk["project"]["beta"],
                       n=n, h=h, w=w, kh=1, kw=1, stride=stride, pad=0,
                       relu=False)
    else:
        skip = a
    out = conv_bn_add(f, blk["conv_2"]["w"], blk["conv_2"]["gamma"],
                      blk["conv_2"]["beta"], skip,
                      n=n, h=oh, w=ow, kh=3, kw=3, stride=1, pad=1)
    return out, (n, oh, ow)


def resnet_forward(params, x_nchw):
    n, _, h, w = x_nchw.shape
    x = jnp.transpose(x_nchw, (0, 2, 3, 1)).astype(jnp.bfloat16)     # NCHW->NHWC
    a = _to_2d(x)

    # Stem: 7x7/2 conv + BN (the reference conv_block has no ReLU here).
    a = conv_bn(a, params["stem"]["w"], params["stem"]["gamma"],
                params["stem"]["beta"],
                n=n, h=h, w=w, kh=7, kw=7, stride=2, pad=3, relu=False)
    h = (h + 6 - 7) // 2 + 1
    w = (w + 6 - 7) // 2 + 1
    c_pad = params["stem"]["gamma"].shape[0]

    # 3x3/2 max-pool (plain JAX).
    a_sp = a[: n * h * w].reshape(n, h, w, c_pad)
    a_sp = maxpool_3x3_s2_p1(a_sp)
    _, h, w, c_pad = a_sp.shape
    a = _to_2d(a_sp)
    shape = (n, h, w)

    for stage in params["stages"]:
        for blk in stage:
            a, shape = residual_block_fwd(a, shape, blk)

    # Global average pool + FC (AdaptiveAvgPool2d((1,1)) + Flatten + Linear).
    n, h, w = shape
    c_real = params["fc_w"].shape[1]
    feats = a[: n * h * w].reshape(n, h, w, -1)[..., :c_real].astype(jnp.float32)
    feats = jnp.mean(feats, axis=(1, 2))
    return fc_forward(feats, params["fc_w"], params["fc_b"])


# --------------------------------- main ----------------------------------------

if __name__ == "__main__":
    key = jax.random.PRNGKey(0)
    kparam, kx = jax.random.split(key)

    params = build_resnet34_params(kparam, num_classes=10)
    x = jax.random.normal(kx, (2, 3, 32, 32), jnp.float32)   # NCHW, like PyTorch

    logits = resnet_forward(params, x)
    logits = jax.block_until_ready(logits)

    assert logits.shape == (2, 10), logits.shape
    assert bool(jnp.all(jnp.isfinite(logits)))
    print("KERNEL_OK")
</pallas_src>

<mosaic_0001>
module attributes {stable_mosaic.version = 11 : i64} {
  func.func @_matmul_stats_kernel(%arg0: i32, %arg1: i32, %arg2: i32, %arg3: memref<128x256xbf16, #tpu.memory_space<vmem>>, %arg4: memref<256x128xbf16, #tpu.memory_space<vmem>>, %arg5: memref<128x128xbf16, #tpu.memory_space<vmem>>, %arg6: memref<1x1x128xf32, #tpu.memory_space<vmem>>, %arg7: memref<1x1x128xf32, #tpu.memory_space<vmem>>, %arg8: memref<128x128xf32, #tpu.memory_space<vmem>>) attributes {dimension_semantics = [#tpu.dimension_semantics<parallel>, #tpu.dimension_semantics<parallel>, #tpu.dimension_semantics<arbitrary>], iteration_bounds = array<i64: 4, 1, 1>, scalar_prefetch = 0 : i64, scratch_operands = 1 : i64, tpu.core_type = #tpu.core_type<tc>, window_params = [{transform_indices = @transform_0, window_bounds = array<i64: 128, 256>}, {transform_indices = @transform_1, window_bounds = array<i64: 256, 128>}, {transform_indices = @transform_2, window_bounds = array<i64: 128, 128>}, {transform_indices = @transform_3, window_bounds = array<i64: 1, 1, 128>}, {transform_indices = @transform_4, window_bounds = array<i64: 1, 1, 128>}]} {
    %c0_i32 = arith.constant 0 : i32
    %0 = arith.cmpi eq, %arg2, %c0_i32 : i32
    %1 = arith.extui %0 : i1 to i32
    %c0_i32_0 = arith.constant 0 : i32
    %2 = arith.cmpi ne, %1, %c0_i32_0 : i32
    scf.if %2 {
      %cst_10 = arith.constant 0.000000e+00 : f32
      %12 = vector.broadcast %cst_10 : f32 to vector<128x128xf32>
      %c0_11 = arith.constant 0 : index
      %c0_12 = arith.constant 0 : index
      %13 = vector.load %arg8[%c0_11, %c0_12] : memref<128x128xf32, #tpu.memory_space<vmem>>, vector<128x128xf32>
      tpu.vector_store %arg8[%c0_11, %c0_12], %12 {strides = array<i32>} : memref<128x128xf32, #tpu.memory_space<vmem>>, vector<128x128xf32>,
    } else {
    }
    %c0 = arith.constant 0 : index
    %c0_1 = arith.constant 0 : index
    %3 = vector.load %arg8[%c0, %c0_1] : memref<128x128xf32, #tpu.memory_space<vmem>>, vector<128x128xf32>
    %c0_2 = arith.constant 0 : index
    %c0_3 = arith.constant 0 : index
    %4 = vector.load %arg3[%c0_2, %c0_3] : memref<128x256xbf16, #tpu.memory_space<vmem>>, vector<128x256xbf16>
    %c0_4 = arith.constant 0 : index
    %c0_5 = arith.constant 0 : index
    %5 = vector.load %arg4[%c0_4, %c0_5] : memref<256x128xbf16, #tpu.memory_space<vmem>>, vector<256x128xbf16>
    %cst = arith.constant dense<0.000000e+00> : vector<128x128xf32>
    %6 = tpu.matmul %4, %5, %cst {dimension_numbers = #tpu.dot_dimension_numbers<[1], [0], [0], [1], [0, 0, 1, 1], [], []>} : vector<128x256xbf16>, vector<256x128xbf16>, vector<128x128xf32> -> vector<128x128xf32>
    %7 = arith.addf %3, %6 : vector<128x128xf32>
    %c0_6 = arith.constant 0 : index
    %c0_7 = arith.constant 0 : index
    %8 = vector.load %arg8[%c0_6, %c0_7] : memref<128x128xf32, #tpu.memory_space<vmem>>, vector<128x128xf32>
    tpu.vector_store %arg8[%c0_6, %c0_7], %7 {strides = array<i32>} : memref<128x128xf32, #tpu.memory_space<vmem>>, vector<128x128xf32>,
    %c0_i32_8 = arith.constant 0 : i32
    %9 = arith.cmpi eq, %arg2, %c0_i32_8 : i32
    %10 = arith.extui %9 : i1 to i32
    %c0_i32_9 = arith.constant 0 : i32
    %11 = arith.cmpi ne, %10, %c0_i32_9 : i32
    scf.if %11 {
      %c0_10 = arith.constant 0 : index
      %c0_11 = arith.constant 0 : index
      %12 = vector.load %arg8[%c0_10, %c0_11] : memref<128x128xf32, #tpu.memory_space<vmem>>, vector<128x128xf32>
      %13 = arith.truncf %12 : vector<128x128xf32> to vector<128x128xbf16>
      %c0_12 = arith.constant 0 : index
      %c0_13 = arith.constant 0 : index
      %14 = vector.load %arg5[%c0_12, %c0_13] : memref<128x128xbf16, #tpu.memory_space<vmem>>, vector<128x128xbf16>
      tpu.vector_store %arg5[%c0_12, %c0_13], %13 {strides = array<i32>} : memref<128x128xbf16, #tpu.memory_space<vmem>>, vector<128x128xbf16>,
      %cst_14 = arith.constant dense<0.000000e+00> : vector<128xf32>
      %15 = vector.multi_reduction <add>, %12, %cst_14 [0] : vector<128x128xf32> to vector<128xf32>
      %16 = vector.shape_cast %15 : vector<128xf32> to vector<1x128xf32>
      %c0_15 = arith.constant 0 : index
      %c0_16 = arith.constant 0 : index
      %c0_17 = arith.constant 0 : index
      %17 = vector.load %arg6[%c0_15, %c0_16, %c0_17] : memref<1x1x128xf32, #tpu.memory_space<vmem>>, vector<1x1x128xf32>
      %18 = vector.shape_cast %17 : vector<1x1x128xf32> to vector<1x128xf32>
      %19 = vector.shape_cast %16 : vector<1x128xf32> to vector<1x1x128xf32>
      tpu.vector_store %arg6[%c0_15, %c0_16, %c0_17], %19 {strides = array<i32>} : memref<1x1x128xf32, #tpu.memory_space<vmem>>, vector<1x1x128xf32>,
      %20 = arith.mulf %12, %12 : vector<128x128xf32>
      %cst_18 = arith.constant dense<0.000000e+00> : vector<128xf32>
      %21 = vector.multi_reduction <add>, %20, %cst_18 [0] : vector<128x128xf32> to vector<128xf32>
      %22 = vector.shape_cast %21 : vector<128xf32> to vector<1x128xf32>
      %c0_19 = arith.constant 0 : index
      %c0_20 = arith.constant 0 : index
      %c0_21 = arith.constant 0 : index
      %23 = vector.load %arg7[%c0_19, %c0_20, %c0_21] : memref<1x1x128xf32, #tpu.memory_space<vmem>>, vector<1x1x128xf32>
      %24 = vector.shape_cast %23 : vector<1x1x128xf32> to vector<1x128xf32>
      %25 = vector.shape_cast %22 : vector<1x128xf32> to vector<1x1x128xf32>
      tpu.vector_store %arg7[%c0_19, %c0_20, %c0_21], %25 {strides = array<i32>} : memref<1x1x128xf32, #tpu.memory_space<vmem>>, vector<1x1x128xf32>,
    } else {
    }
    return
  }
  func.func @transform_0(%arg0: i32, %arg1: i32, %arg2: i32) -> (i32, i32) {
    %c0_i32 = arith.constant 0 : i32
    return %arg0, %arg2 : i32, i32
  }
  func.func @transform_1(%arg0: i32, %arg1: i32, %arg2: i32) -> (i32, i32) {
    %c0_i32 = arith.constant 0 : i32
    return %arg2, %arg1 : i32, i32
  }
  func.func @transform_2(%arg0: i32, %arg1: i32, %arg2: i32) -> (i32, i32) {
    %c0_i32 = arith.constant 0 : i32
    return %arg0, %arg1 : i32, i32
  }
  func.func @transform_3(%arg0: i32, %arg1: i32, %arg2: i32) -> (i32, i32, i32) {
    %c0_i32 = arith.constant 0 : i32
    %c0_i32_0 = arith.constant 0 : i32
    return %arg0, %c0_i32, %arg1 : i32, i32, i32
  }
  func.func @transform_4(%arg0: i32, %arg1: i32, %arg2: i32) -> (i32, i32, i32) {
    %c0_i32 = arith.constant 0 : i32
    %c0_i32_0 = arith.constant 0 : i32
    return %arg0, %c0_i32, %arg1 : i32, i32, i32
  }
}

module attributes {stable_mosaic.version = 11 : i64} {
  func.func @_bn_act_kernel(%arg0: i32, %arg1: memref<512x128xbf16, #tpu.memory_space<vmem>>, %arg2: memref<1x128xf32, #tpu.memory_space<vmem>>, %arg3: memref<1x128xf32, #tpu.memory_space<vmem>>, %arg4: memref<512x128xbf16, #tpu.memory_space<vmem>>) attributes {dimension_semantics = [#tpu.dimension_semantics<parallel>], iteration_bounds = array<i64: 1>, scalar_prefetch = 0 : i64, scratch_operands = 0 : i64, tpu.core_type = #tpu.core_type<tc>, window_params = [{transform_indices = @transform_0, window_bounds = array<i64: 512, 128>}, {pipeline_mode = #tpu.pipeline_mode<synchronous>, transform_indices = @transform_1, window_bounds = array<i64: 1, 128>}, {pipeline_mode = #tpu.pipeline_mode<synchronous>, transform_indices = @transform_2, window_bounds = array<i64: 1, 128>}, {transform_indices = @transform_3, window_bounds = array<i64: 512, 128>}]} {
    %c0 = arith.constant 0 : index
    %c0_0 = arith.constant 0 : index
    %0 = vector.load %arg1[%c0, %c0_0] : memref<512x128xbf16, #tpu.memory_space<vmem>>, vector<512x128xbf16>
    %1 = arith.extf %0 : vector<512x128xbf16> to vector<512x128xf32>
    %c0_1 = arith.constant 0 : index
    %c0_2 = arith.constant 0 : index
    %2 = vector.load %arg2[%c0_1, %c0_2] : memref<1x128xf32, #tpu.memory_space<vmem>>, vector<1x128xf32>
    %3 = vector.broadcast %2 : vector<1x128xf32> to vector<512x128xf32>
    %4 = arith.mulf %1, %3 : vector<512x128xf32>
    %c0_3 = arith.constant 0 : index
    %c0_4 = arith.constant 0 : index
    %5 = vector.load %arg3[%c0_3, %c0_4] : memref<1x128xf32, #tpu.memory_space<vmem>>, vector<1x128xf32>
    %6 = vector.broadcast %5 : vector<1x128xf32> to vector<512x128xf32>
    %7 = arith.addf %4, %6 : vector<512x128xf32>
    %8 = arith.truncf %7 : vector<512x128xf32> to vector<512x128xbf16>
    %c0_5 = arith.constant 0 : index
    %c0_6 = arith.constant 0 : index
    %9 = vector.load %arg4[%c0_5, %c0_6] : memref<512x128xbf16, #tpu.memory_space<vmem>>, vector<512x128xbf16>
    tpu.vector_store %arg4[%c0_5, %c0_6], %8 {strides = array<i32>} : memref<512x128xbf16, #tpu.memory_space<vmem>>, vector<512x128xbf16>,
    return
  }
  func.func @transform_0(%arg0: i32) -> (i32, i32) {
    %c0_i32 = arith.constant 0 : i32
    %c0_i32_0 = arith.constant 0 : i32
    return %arg0, %c0_i32 : i32, i32
  }
  func.func @transform_1(%arg0: i32) -> (i32, i32) {
    %c0_i32 = arith.constant 0 : i32
    %c0_i32_0 = arith.constant 0 : i32
    %c0_i32_1 = arith.constant 0 : i32
    return %c0_i32, %c0_i32_0 : i32, i32
  }
  func.func @transform_2(%arg0: i32) -> (i32, i32) {
    %c0_i32 = arith.constant 0 : i32
    %c0_i32_0 = arith.constant 0 : i32
    %c0_i32_1 = arith.constant 0 : i32
    return %c0_i32, %c0_i32_0 : i32, i32
  }
  func.func @transform_3(%arg0: i32) -> (i32, i32) {
    %c0_i32 = arith.constant 0 : i32
    %c0_i32_0 = arith.constant 0 : i32
    return %arg0, %c0_i32 : i32, i32
  }
}

</mosaic_0001>

<llo_original>
// kernel: conv_bn.2
$region0: #{conv_bn.2}
  #allocation0 [shape = 'u32[]', space=smem, size = 0x4, offset = 0x4, fixed_abs, tag = 'smem constant byte address 0x4 - core index']
  #allocation1 [shape = 'u32[144,128]{1,0:T(1,128)}', space=vmem, size = 0x12000, scoped, tag = 'internal scratch']
  #allocation2 [shape = 'f32[128,128]{1,0:T(8,128)}', space=vmem, size = 0x10000, scoped, tag = 'scratch operand']
  %s0 = inlined_call_operand.vmem [shape: bf16[512,256], index: 0, kind: input, shape index: {}]
  %s1 = inlined_call_operand.vmem [shape: bf16[256,128], index: 1, kind: input, shape index: {}]
  %s2 = inlined_call_operand.vmem [shape: bf16[512,128], index: 2, kind: output, shape index: {0}]
  %s3 = inlined_call_operand.vmem [shape: f32[4,1,128], index: 3, kind: output, shape index: {1}]
  %s4 = inlined_call_operand.vmem [shape: f32[4,1,128], index: 4, kind: output, shape index: {2}]
  %5 = xla_tuple %s2, %s3, %s4
  %s6 = sld [smem:[#allocation0]]
  $region65: #{conv_bn.2} parent=0
    _
  %s8 = ssub.s32 1, %s6
  %s9 = scalar_select 0, %s8, %s6
  loop: start=0, step=1, limit=6
  $region2: #{conv_bn.2} parent=0 // loop_pre_header
    _
  $region3: #{conv_bn.2} parent=0 // loop_header
    %s11 = sphi 0, %s15
    %p12 = scmp.ge.s32.totalorder %s11, 6
    %s18 = sphi 0, %s37
    %s19 = sphi 0, %s33
    %s20 = sphi 0, %s29
    %s21 = sphi 0, %s18
    %s22 = sphi 0, %s19
    %s23 = sphi 0, %s20
    %s24 = sphi 0, %s21
    %s25 = sphi 0, %s22
    %s26 = sphi 0, %s23
    %s42 = sphi 0, %s44
    %s45 = sphi 0, %s42
    %s46 = sphi 0, %s45
    %s62 = sphi 0, %s46
    %s70 = sphi 0, %s72
    %s73 = sphi 0, %s70
    %s74 = sphi 0, %s73
    %s90 = sphi 0, %s74
    %s98 = sphi 0, %s100
    %s101 = sphi 0, %s98
    %s102 = sphi 0, %s101
    %s118 = sphi 0, %s102
    %s126 = sphi 0, %s128
    %s129 = sphi 0, %s126
    %s130 = sphi 0, %s129
    %s146 = sphi 0, %s130
    %s154 = sphi 0, %s156
    %s157 = sphi 0, %s154
    %s158 = sphi 0, %s157
    %s174 = sphi 0, %s158
  $region4: #{conv_bn.2} parent=0 // loop_header_branch
    %14 = sbr.rel (%p12) target = $region8
  $region5: #{conv_bn.2} parent=0 // loop_body
    %s16 = ssub.s32 %s11, 1
    %s17 = ssub.s32 %s11, 2
    %s27 = sadd.s32 1, %s20
    %p28 = scmp.ge.s32.totalorder %s27, 1
    %s29 = scalar_select %p28, 0, %s27
    %s30 = sadd.s32 1, %s19
    %s31 = scalar_select %p28, %s30, %s19
    %p32 = scmp.ge.s32.totalorder %s31, 1
    %s33 = scalar_select %p32, 0, %s31
    %s34 = sadd.s32 1, %s18
    %s35 = scalar_select %p32, %s34, %s18
    %p36 = scmp.ge.s32.totalorder %s35, 4
    %s37 = scalar_select %p36, 0, %s35
    %s38 = ssub.s32 %s18, %s37
    %s39 = ssub.s32 %s20, %s29
    %s40 = sor.u32 %s38, %s39
    %p41 = scmp.eq.s32.totalorder %s40, 0
    %s43 = sadd.s32 %s42, 1
    %s44 = scalar_select %p41, %s42, %s43
    %p47 = pneg %p41
    %p48 = scmp.eq.s32.totalorder %s11, 3
    %p49 = por %p47, %p48
    %p50 = scmp.ne.s32.totalorder %s42, %s45
    %p51 = scmp.eq.s32.totalorder %s11, 0
    %p52 = por %p50, %p51
    %p53 = scmp.ne.s32.totalorder %s42, %s45
    %p54 = scmp.eq.s32.totalorder %s16, 3
    %p55 = por %p53, %p54
    %p56 = scmp.ne.s32.totalorder %s45, %s46
    %p57 = scmp.eq.s32.totalorder %s16, 0
    %p58 = por %p56, %p57
    %p59 = scmp.ne.s32.totalorder %s45, %s46
    %p60 = scmp.eq.s32.totalorder %s17, 3
    %p61 = por %p59, %p60
    %p63 = scmp.ne.s32.totalorder %s46, %s62
    %p64 = scmp.eq.s32.totalorder %s17, 0
    %p65 = por %p63, %p64
    %s66 = ssub.s32 %s20, %s29
    %s67 = ssub.s32 %s19, %s33
    %s68 = sor.u32 %s66, %s67
    %p69 = scmp.eq.s32.totalorder %s68, 0
    %s71 = sadd.s32 %s70, 1
    %s72 = scalar_select %p69, %s70, %s71
    %p75 = pneg %p69
    %p76 = scmp.eq.s32.totalorder %s11, 3
    %p77 = por %p75, %p76
    %p78 = scmp.ne.s32.totalorder %s70, %s73
    %p79 = scmp.eq.s32.totalorder %s11, 0
    %p80 = por %p78, %p79
    %p81 = scmp.ne.s32.totalorder %s70, %s73
    %p82 = scmp.eq.s32.totalorder %s16, 3
    %p83 = por %p81, %p82
    %p84 = scmp.ne.s32.totalorder %s73, %s74
    %p85 = scmp.eq.s32.totalorder %s16, 0
    %p86 = por %p84, %p85
    %p87 = scmp.ne.s32.totalorder %s73, %s74
    %p88 = scmp.eq.s32.totalorder %s17, 3
    %p89 = por %p87, %p88
    %p91 = scmp.ne.s32.totalorder %s74, %s90
    %p92 = scmp.eq.s32.totalorder %s17, 0
    %p93 = por %p91, %p92
    %s94 = ssub.s32 %s18, %s37
    %s95 = ssub.s32 %s19, %s33
    %s96 = sor.u32 %s94, %s95
    %p97 = scmp.eq.s32.totalorder %s96, 0
    %s99 = sadd.s32 %s98, 1
    %s100 = scalar_select %p97, %s98, %s99
    %p103 = pneg %p97
    %p104 = scmp.eq.s32.totalorder %s11, 3
    %p105 = por %p103, %p104
    %p106 = scmp.ne.s32.totalorder %s98, %s101
    %p107 = scmp.eq.s32.totalorder %s11, 0
    %p108 = por %p106, %p107
    %p109 = scmp.ne.s32.totalorder %s98, %s101
    %p110 = scmp.eq.s32.totalorder %s16, 3
    %p111 = por %p109, %p110
    %p112 = scmp.ne.s32.totalorder %s101, %s102
    %p113 = scmp.eq.s32.totalorder %s16, 0
    %p114 = por %p112, %p113
    %p115 = scmp.ne.s32.totalorder %s101, %s102
    %p116 = scmp.eq.s32.totalorder %s17, 3
    %p117 = por %p115, %p116
    %p119 = scmp.ne.s32.totalorder %s102, %s118
    %p120 = scmp.eq.s32.totalorder %s17, 0
    %p121 = por %p119, %p120
    %s122 = ssub.s32 %s18, %s37
    %s123 = ssub.s32 %s19, %s33
    %s124 = sor.u32 %s122, %s123
    %p125 = scmp.eq.s32.totalorder %s124, 0
    %s127 = sadd.s32 %s126, 1
    %s128 = scalar_select %p125, %s126, %s127
    %p131 = pneg %p125
    %p132 = scmp.eq.s32.totalorder %s11, 3
    %p133 = por %p131, %p132
    %p134 = scmp.ne.s32.totalorder %s126, %s129
    %p135 = scmp.eq.s32.totalorder %s11, 0
    %p136 = por %p134, %p135
    %p137 = scmp.ne.s32.totalorder %s126, %s129
    %p138 = scmp.eq.s32.totalorder %s16, 3
    %p139 = por %p137, %p138
    %p140 = scmp.ne.s32.totalorder %s129, %s130
    %p141 = scmp.eq.s32.totalorder %s16, 0
    %p142 = por %p140, %p141
    %p143 = scmp.ne.s32.totalorder %s129, %s130
    %p144 = scmp.eq.s32.totalorder %s17, 3
    %p145 = por %p143, %p144
    %p147 = scmp.ne.s32.totalorder %s130, %s146
    %p148 = scmp.eq.s32.totalorder %s17, 0
    %p149 = por %p147, %p148
    %s150 = ssub.s32 %s18, %s37
    %s151 = ssub.s32 %s19, %s33
    %s152 = sor.u32 %s150, %s151
    %p153 = scmp.eq.s32.totalorder %s152, 0
    %s155 = sadd.s32 %s154, 1
    %s156 = scalar_select %p153, %s154, %s155
    %p159 = pneg %p153
    %p160 = scmp.eq.s32.totalorder %s11, 3
    %p161 = por %p159, %p160
    %p162 = scmp.ne.s32.totalorder %s154, %s157
    %p163 = scmp.eq.s32.totalorder %s11, 0
    %p164 = por %p162, %p163
    %p165 = scmp.ne.s32.totalorder %s154, %s157
    %p166 = scmp.eq.s32.totalorder %s16, 3
    %p167 = por %p165, %p166
    %p168 = scmp.ne.s32.totalorder %s157, %s158
    %p169 = scmp.eq.s32.totalorder %s16, 0
    %p170 = por %p168, %p169
    %p171 = scmp.ne.s32.totalorder %s157, %s158
    %p172 = scmp.eq.s32.totalorder %s17, 3
    %p173 = por %p171, %p172
    %p175 = scmp.ne.s32.totalorder %s158, %s174
    %p176 = scmp.eq.s32.totalorder %s17, 0
    %p177 = por %p175, %p176
    %p178 = scmp.le.s32.totalorder 1, %s11
    %p179 = scmp.lt.s32.totalorder %s11, 5
    %p180 = pnand %p178, %p179
    %p181 = pneg %p180
    // Predicated region
    $region9: #{conv_bn.2} parent=5 // pred_check
      _
    $region10: #{conv_bn.2} parent=5 // pred_check_branch
      %183 = sbr.rel (%p180) target = $region12
    $region11: #{conv_bn.2} parent=5 // pred_region
      %s184 = ssub.s32 %s11, 1
      // Predicated region
      $region13: #{conv_bn.2} parent=11 // pred_check
        %p185 = pneg %p86
      $region14: #{conv_bn.2} parent=11 // pred_check_branch
        %187 = sbr.rel (%p185) target = $region16
      $region15: #{conv_bn.2} parent=11 // pred_region
        %s188 = smul.u32 32, %s23
        %p189 = scmp.lt.s32.totalorder %s188, 31
        %s190 = scalar_select %p189, %s188, 31
        %p191 = scmp.lt.s32.totalorder %s22, 0
        %s192 = scalar_select %p191, %s22, 0
        %s193 = sadd.s32 %s192, %s190
        %s194 = smul.addr %s193, 4
        %s195 = scalar_lea.vmem %s1, %s194
        %s196 = smul.u32 32, %s23
      $region16: #{conv_bn.2} parent=11 // pred_fallthru
        _
    $region12: #{conv_bn.2} parent=5 // pred_fallthru
      _
    %p197 = scmp.lt.s32.totalorder %s11, 4
    // Predicated region
    $region17: #{conv_bn.2} parent=5 // pred_check
      %p198 = pneg %p197
    $region18: #{conv_bn.2} parent=5 // pred_check_branch
      %200 = sbr.rel (%p198) target = $region20
    $region19: #{conv_bn.2} parent=5 // pred_region
      // Predicated region
      $region21: #{conv_bn.2} parent=19 // pred_check
        %p201 = pneg %p52
      $region22: #{conv_bn.2} parent=19 // pred_check_branch
        %203 = sbr.rel (%p201) target = $region24
      $region23: #{conv_bn.2} parent=19 // pred_region
        %s204 = smul.u32 16, %s18
        %s205 = smul.u32 2, %s20
        %p206 = scmp.lt.s32.totalorder %s204, 63
        %s207 = scalar_select %p206, %s204, 63
        %p208 = scmp.lt.s32.totalorder %s205, 1
        %s209 = scalar_select %p208, %s205, 1
        %s210 = smul.addr %s207, 2
        %s211 = sadd.s32 %s209, %s210
        %s212 = smul.addr %s211, 4
        %s213 = scalar_lea.vmem %s0, %s212
        %s214 = smul.u32 16, %s18
        %s215 = smul.u32 2, %s20
      $region24: #{conv_bn.2} parent=19 // pred_fallthru
        _
    $region20: #{conv_bn.2} parent=5 // pred_fallthru
      _
    %p216 = scmp.le.s32.totalorder 1, %s11
    %p217 = scmp.lt.s32.totalorder %s11, 5
    %p218 = pnand %p216, %p217
    %p219 = pneg %p218
    // Predicated region
    $region25: #{conv_bn.2} parent=5 // pred_check
      _
    $region26: #{conv_bn.2} parent=5 // pred_check_branch
      %221 = sbr.rel (%p218) target = $region28
    $region27: #{conv_bn.2} parent=5 // pred_region
      %s222 = ssub.s32 %s11, 1
      %s223 = smul.u32 16, %s21
      %s224 = smul.u32 2, %s23
      %p225 = scmp.lt.s32.totalorder %s223, 63
      %s226 = scalar_select %p225, %s223, 63
      %p227 = scmp.lt.s32.totalorder %s224, 1
      %s228 = scalar_select %p227, %s224, 1
      %s229 = smul.addr %s226, 2
      %s230 = sadd.s32 %s228, %s229
      %s231 = smul.addr %s230, 4
      %s232 = scalar_lea.vmem %s0, %s231
      %p233 = pneg %p58
      %p234 = pneg %p55
      %s235 = smul.u32 32, %s23
      %p236 = scmp.lt.s32.totalorder %s235, 31
      %s237 = scalar_select %p236, %s235, 31
      %p238 = scmp.lt.s32.totalorder %s22, 0
      %s239 = scalar_select %p238, %s22, 0
      %s240 = sadd.s32 %s239, %s237
      %s241 = smul.addr %s240, 4
      %s242 = scalar_lea.vmem %s1, %s241
      %p243 = pneg %p86
      %p244 = pneg %p83
      %p245 = pneg %p114
      %p246 = pneg %p111
      %s247 = smul.u32 16, %s21
      %p248 = scmp.lt.s32.totalorder %s247, 63
      %s249 = scalar_select %p248, %s247, 63
      %p250 = scmp.lt.s32.totalorder %s22, 0
      %s251 = scalar_select %p250, %s22, 0
      %s252 = sadd.s32 %s251, %s249
      %s253 = smul.addr %s252, 4
      %s254 = scalar_lea.vmem %s2, %s253
      %p255 = pneg %p142
      %p256 = pneg %p139
      %p257 = scmp.lt.s32.totalorder %s21, 3
      %s258 = scalar_select %p257, %s21, 3
      %p259 = scmp.lt.s32.totalorder %s22, 0
      %s260 = scalar_select %p259, %s22, 0
      %s261 = sadd.s32 %s260, %s258
      %s262 = scalar_lea.vmem %s3, %s261
      %p263 = pneg %p170
      %p264 = pneg %p167
      %p265 = scmp.lt.s32.totalorder %s21, 3
      %s266 = scalar_select %p265, %s21, 3
      %p267 = scmp.lt.s32.totalorder %s22, 0
      %s268 = scalar_select %p267, %s22, 0
      %s269 = sadd.s32 %s268, %s266
      %s270 = scalar_lea.vmem %s4, %s269
      %s271 = smul.u32 16, %s21
      %s272 = smul.u32 2, %s23
      %p273 = scmp.lt.s32.totalorder %s271, 63
      %s274 = scalar_select %p273, %s271, 63
      %p275 = scmp.lt.s32.totalorder %s272, 1
      %s276 = scalar_select %p275, %s272, 1
      %s277 = smul.addr %s274, 2
      %s278 = sadd.s32 %s276, %s277
      %s279 = smul.addr %s278, 4
      %s280 = scalar_lea.vmem %s0, %s279
      %s281 = smul.u32 16, %s21
      %s282 = smul.u32 2, %s23
      %s283 = smul.u32 32, %s23
      %p284 = scmp.lt.s32.totalorder %s283, 31
      %s285 = scalar_select %p284, %s283, 31
      %p286 = scmp.lt.s32.totalorder %s22, 0
      %s287 = scalar_select %p286, %s22, 0
      %s288 = sadd.s32 %s287, %s285
      %s289 = smul.addr %s288, 4
      %s290 = scalar_lea.vmem %s1, %s289
      %s291 = smul.u32 32, %s23
      %s292 = smul.u32 16, %s21
      %p293 = scmp.lt.s32.totalorder %s292, 63
      %s294 = scalar_select %p293, %s292, 63
      %p295 = scmp.lt.s32.totalorder %s22, 0
      %s296 = scalar_select %p295, %s22, 0
      %s297 = sadd.s32 %s296, %s294
      %s298 = smul.addr %s297, 4
      %s299 = scalar_lea.vmem %s2, %s298
      %s300 = smul.u32 16, %s21
      %p301 = scmp.lt.s32.totalorder %s21, 3
      %s302 = scalar_select %p301, %s21, 3
      %p303 = scmp.lt.s32.totalorder %s22, 0
      %s304 = scalar_select %p303, %s22, 0
      %s305 = sadd.s32 %s304, %s302
      %s306 = scalar_lea.vmem %s3, %s305
      %p307 = scmp.lt.s32.totalorder %s21, 3
      %s308 = scalar_select %p307, %s21, 3
      %p309 = scmp.lt.s32.totalorder %s22, 0
      %s310 = scalar_select %p309, %s22, 0
      %s311 = sadd.s32 %s310, %s308
      %s312 = scalar_lea.vmem %s4, %s311
      %p314 = scmp.eq.s32.totalorder %s23, 0
      // Predicated region
      $region29: #{conv_bn.2} parent=27 // pred_check
        %p315 = pneg %p314
      $region30: #{conv_bn.2} parent=27 // pred_check_branch
        %317 = sbr.rel (%p315) target = $region32
      $region31: #{conv_bn.2} parent=27 // pred_region
        %318 = vst [vmem:[#allocation2] sm:$0xff] 0.0
        %319 = vst [vmem:[#allocation2 + $0x8] sm:$0xff] 0.0
        %320 = vst [vmem:[#allocation2 + $0x10] sm:$0xff] 0.0
        %321 = vst [vmem:[#allocation2 + $0x18] sm:$0xff] 0.0
        %322 = vst [vmem:[#allocation2 + $0x20] sm:$0xff] 0.0
        %323 = vst [vmem:[#allocation2 + $0x28] sm:$0xff] 0.0
        %324 = vst [vmem:[#allocation2 + $0x30] sm:$0xff] 0.0
        %325 = vst [vmem:[#allocation2 + $0x38] sm:$0xff] 0.0
        %326 = vst [vmem:[#allocation2 + $0x40] sm:$0xff] 0.0
        %327 = vst [vmem:[#allocation2 + $0x48] sm:$0xff] 0.0
        %328 = vst [vmem:[#allocation2 + $0x50] sm:$0xff] 0.0
        %329 = vst [vmem:[#allocation2 + $0x58] sm:$0xff] 0.0
        %330 = vst [vmem:[#allocation2 + $0x60] sm:$0xff] 0.0
        %331 = vst [vmem:[#allocation2 + $0x68] sm:$0xff] 0.0
        %332 = vst [vmem:[#allocation2 + $0x70] sm:$0xff] 0.0
        %333 = vst [vmem:[#allocation2 + $0x78] sm:$0xff] 0.0
      $region32: #{conv_bn.2} parent=27 // pred_fallthru
        _
      %v334 = vld [vmem:[#allocation2] sm:$0xff]
      %v335 = vld [vmem:[#allocation2 + $0x8] sm:$0xff]
      %v336 = vld [vmem:[#allocation2 + $0x10] sm:$0xff]
      %v337 = vld [vmem:[#allocation2 + $0x18] sm:$0xff]
      %v338 = vld [vmem:[#allocation2 + $0x20] sm:$0xff]
      %v339 = vld [vmem:[#allocation2 + $0x28] sm:$0xff]
      %v340 = vld [vmem:[#allocation2 + $0x30] sm:$0xff]
      %v341 = vld [vmem:[#allocation2 + $0x38] sm:$0xff]
      %v342 = vld [vmem:[#allocation2 + $0x40] sm:$0xff]
      %v343 = vld [vmem:[#allocation2 + $0x48] sm:$0xff]
      %v344 = vld [vmem:[#allocation2 + $0x50] sm:$0xff]
      %v345 = vld [vmem:[#allocation2 + $0x58] sm:$0xff]
      %v346 = vld [vmem:[#allocation2 + $0x60] sm:$0xff]
      %v347 = vld [vmem:[#allocation2 + $0x68] sm:$0xff]
      %v348 = vld [vmem:[#allocation2 + $0x70] sm:$0xff]
      %v349 = vld [vmem:[#allocation2 + $0x78] sm:$0xff]
      %v350 = vld [vmem:[%s280] sm:$0xff]
      %v351 = vld [vmem:[%s280 + $0x8] sm:$0xff]
      %v352 = vld [vmem:[%s280 + $0x10] sm:$0xff]
      %v353 = vld [vmem:[%s280 + $0x18] sm:$0xff]
      %v354 = vld [vmem:[%s280 + $0x20] sm:$0xff]
      %v355 = vld [vmem:[%s280 + $0x28] sm:$0xff]
      %v356 = vld [vmem:[%s280 + $0x30] sm:$0xff]
      %v357 = vld [vmem:[%s280 + $0x38] sm:$0xff]
      %v358 = vld [vmem:[%s280 + $0x40] sm:$0xff]
      %v359 = vld [vmem:[%s280 + $0x48] sm:$0xff]
      %v360 = vld [vmem:[%s280 + $0x50] sm:$0xff]
      %v361 = vld [vmem:[%s280 + $0x58] sm:$0xff]
      %v362 = vld [vmem:[%s280 + $0x60] sm:$0xff]
      %v363 = vld [vmem:[%s280 + $0x68] sm:$0xff]
      %v364 = vld [vmem:[%s280 + $0x70] sm:$0xff]
      %v365 = vld [vmem:[%s280 + $0x78] sm:$0xff]
      %v366 = vld [vmem:[%s290] sm:$0xf]
      %v367 = vld [vmem:[%s290 + $0x4] sm:$0xf]
      %v368 = vld [vmem:[%s290 + $0x8] sm:$0xf]
      %v369 = vld [vmem:[%s290 + $0xc] sm:$0xf]
      %v370 = vld [vmem:[%s290 + $0x10] sm:$0xf]
      %v371 = vld [vmem:[%s290 + $0x14] sm:$0xf]
      %v372 = vld [vmem:[%s290 + $0x18] sm:$0xf]
      %v373 = vld [vmem:[%s290 + $0x1c] sm:$0xf]
      %v374 = vld [vmem:[%s290 + $0x20] sm:$0xf]
      %v375 = vld [vmem:[%s290 + $0x24] sm:$0xf]
      %v376 = vld [vmem:[%s290 + $0x28] sm:$0xf]
      %v377 = vld [vmem:[%s290 + $0x2c] sm:$0xf]
      %v378 = vld [vmem:[%s290 + $0x30] sm:$0xf]
      %v379 = vld [vmem:[%s290 + $0x34] sm:$0xf]
      %v380 = vld [vmem:[%s290 + $0x38] sm:$0xf]
      %v381 = vld [vmem:[%s290 + $0x3c] sm:$0xf]
      %v382 = vld [vmem:[%s290 + $0x40] sm:$0xf]
      %v383 = vld [vmem:[%s290 + $0x44] sm:$0xf]
      %v384 = vld [vmem:[%s290 + $0x48] sm:$0xf]
      %v385 = vld [vmem:[%s290 + $0x4c] sm:$0xf]
      %v386 = vld [vmem:[%s290 + $0x50] sm:$0xf]
      %v387 = vld [vmem:[%s290 + $0x54] sm:$0xf]
      %v388 = vld [vmem:[%s290 + $0x58] sm:$0xf]
      %v389 = vld [vmem:[%s290 + $0x5c] sm:$0xf]
      %v390 = vld [vmem:[%s290 + $0x60] sm:$0xf]
      %v391 = vld [vmem:[%s290 + $0x64] sm:$0xf]
      %v392 = vld [vmem:[%s290 + $0x68] sm:$0xf]
      %v393 = vld [vmem:[%s290 + $0x6c] sm:$0xf]
      %v394 = vld [vmem:[%s290 + $0x70] sm:$0xf]
      %v395 = vld [vmem:[%s290 + $0x74] sm:$0xf]
      %v396 = vld [vmem:[%s290 + $0x78] sm:$0xf]
      %v397 = vld [vmem:[%s290 + $0x7c] sm:$0xf]
      %v414 = vunpack.c.l.b16 %v350
      %v415 = vunpack.c.h.b16 %v350
      %v416 = vunpack.c.l.b16 %v351
      %v417 = vunpack.c.h.b16 %v351
      %v418 = vunpack.c.l.b16 %v352
      %v419 = vunpack.c.h.b16 %v352
      %v420 = vunpack.c.l.b16 %v353
      %v421 = vunpack.c.h.b16 %v353
      %v422 = vunpack.c.l.b16 %v354
      %v423 = vunpack.c.h.b16 %v354
      %v424 = vunpack.c.l.b16 %v355
      %v425 = vunpack.c.h.b16 %v355
      %v426 = vunpack.c.l.b16 %v356
      %v427 = vunpack.c.h.b16 %v356
      %v428 = vunpack.c.l.b16 %v357
      %v429 = vunpack.c.h.b16 %v357
      %v430 = vunpack.c.l.b16 %v358
      %v431 = vunpack.c.h.b16 %v358
      %v432 = vunpack.c.l.b16 %v359
      %v433 = vunpack.c.h.b16 %v359
      %v434 = vunpack.c.l.b16 %v360
      %v435 = vunpack.c.h.b16 %v360
      %v436 = vunpack.c.l.b16 %v361
      %v437 = vunpack.c.h.b16 %v361
      %v438 = vunpack.c.l.b16 %v362
      %v439 = vunpack.c.h.b16 %v362
      %v440 = vunpack.c.l.b16 %v363
      %v441 = vunpack.c.h.b16 %v363
      %v442 = vunpack.c.l.b16 %v364
      %v443 = vunpack.c.h.b16 %v364
      %v444 = vunpack.c.l.b16 %v365
      %v445 = vunpack.c.h.b16 %v365
      %v446 = vpack.c.b16 %v416, %v414
      %v447 = vpack.c.b16 %v417, %v415
      %v448 = vpack.c.b16 %v420, %v418
      %v449 = vpack.c.b16 %v421, %v419
      %v450 = vpack.c.b16 %v424, %v422
      %v451 = vpack.c.b16 %v425, %v423
      %v452 = vpack.c.b16 %v428, %v426
      %v453 = vpack.c.b16 %v429, %v427
      %v454 = vpack.c.b16 %v432, %v430
      %v455 = vpack.c.b16 %v433, %v431
      %v456 = vpack.c.b16 %v436, %v434
      %v457 = vpack.c.b16 %v437, %v435
      %v458 = vpack.c.b16 %v440, %v438
      %v459 = vpack.c.b16 %v441, %v439
      %v460 = vpack.c.b16 %v444, %v442
      %v461 = vpack.c.b16 %v445, %v443
      %v510 = vunpack.c.l.b16 %v366
      %v511 = vunpack.c.l.b16 %v367
      %v512 = vunpack.c.l.b16 %v368
      %v513 = vunpack.c.l.b16 %v369
      %v514 = vunpack.c.l.b16 %v370
      %v515 = vunpack.c.l.b16 %v371
      %v516 = vunpack.c.l.b16 %v372
      %v517 = vunpack.c.l.b16 %v373
      %v518 = vunpack.c.l.b16 %v374
      %v519 = vunpack.c.l.b16 %v375
      %v520 = vunpack.c.l.b16 %v376
      %v521 = vunpack.c.l.b16 %v377
      %v522 = vunpack.c.l.b16 %v378
      %v523 = vunpack.c.l.b16 %v379
      %v524 = vunpack.c.l.b16 %v380
      %v525 = vunpack.c.l.b16 %v381
      %v526 = vunpack.c.l.b16 %v382
      %v527 = vunpack.c.l.b16 %v383
      %v528 = vunpack.c.l.b16 %v384
      %v529 = vunpack.c.l.b16 %v385
      %v530 = vunpack.c.l.b16 %v386
      %v531 = vunpack.c.l.b16 %v387
      %v532 = vunpack.c.l.b16 %v388
      %v533 = vunpack.c.l.b16 %v389
      %v534 = vunpack.c.l.b16 %v390
      %v535 = vunpack.c.l.b16 %v391
      %v536 = vunpack.c.l.b16 %v392
      %v537 = vunpack.c.l.b16 %v393
      %v538 = vunpack.c.l.b16 %v394
      %v539 = vunpack.c.l.b16 %v395
      %v540 = vunpack.c.l.b16 %v396
      %v541 = vunpack.c.l.b16 %v397
      %v542 = vpack.c.b16 %v511, %v510
      %v543 = vpack.c.b16 %v513, %v512
      %v544 = vpack.c.b16 %v515, %v514
      %v545 = vpack.c.b16 %v517, %v516
      %v546 = vpack.c.b16 %v519, %v518
      %v547 = vpack.c.b16 %v521, %v520
      %v548 = vpack.c.b16 %v523, %v522
      %v549 = vpack.c.b16 %v525, %v524
      %v550 = vpack.c.b16 %v527, %v526
      %v551 = vpack.c.b16 %v529, %v528
      %v552 = vpack.c.b16 %v531, %v530
      %v553 = vpack.c.b16 %v533, %v532
      %v554 = vpack.c.b16 %v535, %v534
      %v555 = vpack.c.b16 %v537, %v536
      %v556 = vpack.c.b16 %v539, %v538
      %v557 = vpack.c.b16 %v541, %v540
      %574 = vmatprep.subr.bf16.mxu0 0
      %575 = vmatpush1.bf16.msra.mxu0 %v542
      %576 = vmatprep.subr.bf16.mxu0 0
      %577 = vmatpush1.bf16.msra.mxu0 %v543
      %578 = vmatprep.subr.bf16.mxu0 0
      %579 = vmatpush1.bf16.msra.mxu0 %v544
      %580 = vmatprep.subr.bf16.mxu0 0
      %581 = vmatpush1.bf16.msra.mxu0 %v545
      %582 = vmatprep.subr.bf16.mxu0 0
      %583 = vmatpush1.bf16.msra.mxu0 %v546
      %584 = vmatprep.subr.bf16.mxu0 0
      %585 = vmatpush1.bf16.msra.mxu0 %v547
      %586 = vmatprep.subr.bf16.mxu0 0
      %587 = vmatpush1.bf16.msra.mxu0 %v548
      %588 = vmatprep.subr.bf16.mxu0 0
      %589 = vmatpush1.bf16.msra.mxu0 %v549
      %590 = vmatprep.subr.bf16.mxu0 0
      %591 = vmatpush1.bf16.msra.mxu0 %v550
      %592 = vmatprep.subr.bf16.mxu0 0
      %593 = vmatpush1.bf16.msra.mxu0 %v551
      %594 = vmatprep.subr.bf16.mxu0 0
      %595 = vmatpush1.bf16.msra.mxu0 %v552
      %596 = vmatprep.subr.bf16.mxu0 0
      %597 = vmatpush1.bf16.msra.mxu0 %v553
      %598 = vmatprep.subr.bf16.mxu0 0
      %599 = vmatpush1.bf16.msra.mxu0 %v554
      %600 = vmatprep.subr.bf16.mxu0 0
      %601 = vmatpush1.bf16.msra.mxu0 %v555
      %602 = vmatprep.subr.bf16.mxu0 0
      %603 = vmatpush1.bf16.msra.mxu0 %v556
      %604 = vmatprep.subr.bf16.mxu0 0
      %605 = vmatpush1.bf16.msra.mxu0 %v557
      %606 = vmatprep.mubr.bf16.mxu0 %v447
      %607 = vmatmul.mubr.bf16.gmra.mrb[0].mxu0 %v446
      %v608 = vpop.f32.mrb[0].mxu0
      %v609 = vadd.f32 0.0, %v608
      %v610 = vpop.f32.mrb[0].mxu0
      %v611 = vpop.f32.mrb[0].mxu0
      %v612 = vadd.f32 0.0, %v611
      %v613 = vpop.f32.mrb[0].mxu0
      %614 = vmatprep.mubr.bf16.mxu0 %v449
      %615 = vmatmul.mubr.bf16.gmra.mrb[0].mxu0 %v448
      %v616 = vpop.f32.mrb[0].mxu0
      %v617 = vadd.f32 0.0, %v616
      %v618 = vpop.f32.mrb[0].mxu0
      %v619 = vpop.f32.mrb[0].mxu0
      %v620 = vadd.f32 0.0, %v619
      %v621 = vpop.f32.mrb[0].mxu0
      %622 = vmatprep.mubr.bf16.mxu0 %v451
      %623 = vmatmul.mubr.bf16.gmra.mrb[0].mxu0 %v450
      %v624 = vpop.f32.mrb[0].mxu0
      %v625 = vadd.f32 0.0, %v624
      %v626 = vpop.f32.mrb[0].mxu0
      %v627 = vpop.f32.mrb[0].mxu0
      %v628 = vadd.f32 0.0, %v627
      %v629 = vpop.f32.mrb[0].mxu0
      %630 = vmatprep.mubr.bf16.mxu0 %v453
      %631 = vmatmul.mubr.bf16.gmra.mrb[0].mxu0 %v452
      %v632 = vpop.f32.mrb[0].mxu0
      %v633 = vadd.f32 0.0, %v632
      %v634 = vpop.f32.mrb[0].mxu0
      %v635 = vpop.f32.mrb[0].mxu0
      %v636 = vadd.f32 0.0, %v635
      %v637 = vpop.f32.mrb[0].mxu0
      %638 = vmatprep.mubr.bf16.mxu0 %v455
      %639 = vmatmul.mubr.bf16.gmra.mrb[0].mxu0 %v454
      %v640 = vpop.f32.mrb[0].mxu0
      %v641 = vadd.f32 0.0, %v640
      %v642 = vpop.f32.mrb[0].mxu0
      %v643 = vpop.f32.mrb[0].mxu0
      %v644 = vadd.f32 0.0, %v643
      %v645 = vpop.f32.mrb[0].mxu0
      %646 = vmatprep.mubr.bf16.mxu0 %v457
      %647 = vmatmul.mubr.bf16.gmra.mrb[0].mxu0 %v456
      %v648 = vpop.f32.mrb[0].mxu0
      %v649 = vadd.f32 0.0, %v648
      %v650 = vpop.f32.mrb[0].mxu0
      %v651 = vpop.f32.mrb[0].mxu0
      %v652 = vadd.f32 0.0, %v651
      %v653 = vpop.f32.mrb[0].mxu0
      %654 = vmatprep.mubr.bf16.mxu0 %v459
      %655 = vmatmul.mubr.bf16.gmra.mrb[0].mxu0 %v458
      %v656 = vpop.f32.mrb[0].mxu0
      %v657 = vadd.f32 0.0, %v656
      %v658 = vpop.f32.mrb[0].mxu0
      %v659 = vpop.f32.mrb[0].mxu0
      %v660 = vadd.f32 0.0, %v659
      %v661 = vpop.f32.mrb[0].mxu0
      %662 = vmatprep.mubr.bf16.mxu0 %v461
      %663 = vmatmul.mubr.bf16.gmra.mrb[0].mxu0 %v460
      %v664 = vpop.f32.mrb[0].mxu0
      %v665 = vadd.f32 0.0, %v664
      %v666 = vpop.f32.mrb[0].mxu0
      %v667 = vpop.f32.mrb[0].mxu0
      %v668 = vadd.f32 0.0, %v667
      %v669 = vpop.f32.mrb[0].mxu0
      %670 = vdwg.mxu0
      %v671 = vadd.f32 %v334, %v609
      %v672 = vadd.f32 %v335, %v612
      %v673 = vadd.f32 %v336, %v617
      %v674 = vadd.f32 %v337, %v620
      %v675 = vadd.f32 %v338, %v625
      %v676 = vadd.f32 %v339, %v628
      %v677 = vadd.f32 %v340, %v633
      %v678 = vadd.f32 %v341, %v636
      %v679 = vadd.f32 %v342, %v641
      %v680 = vadd.f32 %v343, %v644
      %v681 = vadd.f32 %v344, %v649
      %v682 = vadd.f32 %v345, %v652
      %v683 = vadd.f32 %v346, %v657
      %v684 = vadd.f32 %v347, %v660
      %v685 = vadd.f32 %v348, %v665
      %v686 = vadd.f32 %v349, %v668
      %687 = vst [vmem:[#allocation2] sm:$0xff] %v671
      %688 = vst [vmem:[#allocation2 + $0x8] sm:$0xff] %v672
      %689 = vst [vmem:[#allocation2 + $0x10] sm:$0xff] %v673
      %690 = vst [vmem:[#allocation2 + $0x18] sm:$0xff] %v674
      %691 = vst [vmem:[#allocation2 + $0x20] sm:$0xff] %v675
      %692 = vst [vmem:[#allocation2 + $0x28] sm:$0xff] %v676
      %693 = vst [vmem:[#allocation2 + $0x30] sm:$0xff] %v677
      %694 = vst [vmem:[#allocation2 + $0x38] sm:$0xff] %v678
      %695 = vst [vmem:[#allocation2 + $0x40] sm:$0xff] %v679
      %696 = vst [vmem:[#allocation2 + $0x48] sm:$0xff] %v680
      %697 = vst [vmem:[#allocation2 + $0x50] sm:$0xff] %v681
      %698 = vst [vmem:[#allocation2 + $0x58] sm:$0xff] %v682
      %699 = vst [vmem:[#allocation2 + $0x60] sm:$0xff] %v683
      %700 = vst [vmem:[#allocation2 + $0x68] sm:$0xff] %v684
      %701 = vst [vmem:[#allocation2 + $0x70] sm:$0xff] %v685
      %702 = vst [vmem:[#allocation2 + $0x78] sm:$0xff] %v686
      // Predicated region
      $region33: #{conv_bn.2} parent=27 // pred_check
        %p703 = pneg %p314
      $region34: #{conv_bn.2} parent=27 // pred_check_branch
        %705 = sbr.rel (%p703) target = $region36
      $region35: #{conv_bn.2} parent=27 // pred_region
        %v706 = vld [vmem:[#allocation2] sm:$0xff]
        %v707 = vld [vmem:[#allocation2 + $0x8] sm:$0xff]
        %v708 = vld [vmem:[#allocation2 + $0x10] sm:$0xff]
        %v709 = vld [vmem:[#allocation2 + $0x18] sm:$0xff]
        %v710 = vld [vmem:[#allocation2 + $0x20] sm:$0xff]
        %v711 = vld [vmem:[#allocation2 + $0x28] sm:$0xff]
        %v712 = vld [vmem:[#allocation2 + $0x30] sm:$0xff]
        %v713 = vld [vmem:[#allocation2 + $0x38] sm:$0xff]
        %v714 = vld [vmem:[#allocation2 + $0x40] sm:$0xff]
        %v715 = vld [vmem:[#allocation2 + $0x48] sm:$0xff]
        %v716 = vld [vmem:[#allocation2 + $0x50] sm:$0xff]
        %v717 = vld [vmem:[#allocation2 + $0x58] sm:$0xff]
        %v718 = vld [vmem:[#allocation2 + $0x60] sm:$0xff]
        %v719 = vld [vmem:[#allocation2 + $0x68] sm:$0xff]
        %v720 = vld [vmem:[#allocation2 + $0x70] sm:$0xff]
        %v721 = vld [vmem:[#allocation2 + $0x78] sm:$0xff]
        %v722 = vpack.c.bf16 %v707, %v706
        %v723 = vpack.c.bf16 %v709, %v708
        %v724 = vpack.c.bf16 %v711, %v710
        %v725 = vpack.c.bf16 %v713, %v712
        %v726 = vpack.c.bf16 %v715, %v714
        %v727 = vpack.c.bf16 %v717, %v716
        %v728 = vpack.c.bf16 %v719, %v718
        %v729 = vpack.c.bf16 %v721, %v720
        %v738 = vunpack.c.l.b16 %v722
        %v739 = vunpack.c.h.b16 %v722
        %v740 = vunpack.c.l.b16 %v723
        %v741 = vunpack.c.h.b16 %v723
        %v742 = vunpack.c.l.b16 %v724
        %v743 = vunpack.c.h.b16 %v724
        %v744 = vunpack.c.l.b16 %v725
        %v745 = vunpack.c.h.b16 %v725
        %v746 = vunpack.c.l.b16 %v726
        %v747 = vunpack.c.h.b16 %v726
        %v748 = vunpack.c.l.b16 %v727
        %v749 = vunpack.c.h.b16 %v727
        %v750 = vunpack.c.l.b16 %v728
        %v751 = vunpack.c.h.b16 %v728
        %v752 = vunpack.c.l.b16 %v729
        %v753 = vunpack.c.h.b16 %v729
        %v754 = vpack.c.b16 %v738, %v738
        %v755 = vpack.c.b16 %v739, %v739
        %v756 = vpack.c.b16 %v740, %v740
        %v757 = vpack.c.b16 %v741, %v741
        %v758 = vpack.c.b16 %v742, %v742
        %v759 = vpack.c.b16 %v743, %v743
        %v760 = vpack.c.b16 %v744, %v744
        %v761 = vpack.c.b16 %v745, %v745
        %v762 = vpack.c.b16 %v746, %v746
        %v763 = vpack.c.b16 %v747, %v747
        %v764 = vpack.c.b16 %v748, %v748
        %v765 = vpack.c.b16 %v749, %v749
        %v766 = vpack.c.b16 %v750, %v750
        %v767 = vpack.c.b16 %v751, %v751
        %v768 = vpack.c.b16 %v752, %v752
        %v769 = vpack.c.b16 %v753, %v753
        %786 = vst [vmem:[%s299] sm:$0xf] %v754
        %787 = vst [vmem:[%s299 + $0x4] sm:$0xf] %v755
        %788 = vst [vmem:[%s299 + $0x8] sm:$0xf] %v756
        %789 = vst [vmem:[%s299 + $0xc] sm:$0xf] %v757
        %790 = vst [vmem:[%s299 + $0x10] sm:$0xf] %v758
        %791 = vst [vmem:[%s299 + $0x14] sm:$0xf] %v759
        %792 = vst [vmem:[%s299 + $0x18] sm:$0xf] %v760
        %793 = vst [vmem:[%s299 + $0x1c] sm:$0xf] %v761
        %794 = vst [vmem:[%s299 + $0x20] sm:$0xf] %v762
        %795 = vst [vmem:[%s299 + $0x24] sm:$0xf] %v763
        %796 = vst [vmem:[%s299 + $0x28] sm:$0xf] %v764
        %797 = vst [vmem:[%s299 + $0x2c] sm:$0xf] %v765
        %798 = vst [vmem:[%s299 + $0x30] sm:$0xf] %v766
        %799 = vst [vmem:[%s299 + $0x34] sm:$0xf] %v767
        %800 = vst [vmem:[%s299 + $0x38] sm:$0xf] %v768
        %801 = vst [vmem:[%s299 + $0x3c] sm:$0xf] %v769
        %v802 = vadd.f32 %v706, %v707
        %v803 = vadd.f32 %v802, %v708
        %v804 = vadd.f32 %v803, %v709
        %v805 = vadd.f32 %v804, %v710
        %v806 = vadd.f32 %v805, %v711
        %v807 = vadd.f32 %v806, %v712
        %v808 = vadd.f32 %v807, %v713
        %v809 = vadd.f32 %v808, %v714
        %v810 = vadd.f32 %v809, %v715
        %v811 = vadd.f32 %v810, %v716
        %v812 = vadd.f32 %v811, %v717
        %v813 = vadd.f32 %v812, %v718
        %v814 = vadd.f32 %v813, %v719
        %v815 = vadd.f32 %v814, %v720
        %v816 = vadd.f32 %v815, %v721
        %v817 = vrot.slane %v816, 4
        %v818 = vadd.f32 %v816, %v817
        %v819 = vrot.slane %v818, 2
        %v820 = vadd.f32 %v818, %v819
        %v821 = vrot.slane %v820, 1
        %v822 = vadd.f32 %v820, %v821
        %823 = vst [vmem:[%s306] sm:$0x1] %v822
        %v824 = vmul.f32 %v706, %v706
        %v825 = vmul.f32 %v707, %v707
        %v826 = vmul.f32 %v708, %v708
        %v827 = vmul.f32 %v709, %v709
        %v828 = vmul.f32 %v710, %v710
        %v829 = vmul.f32 %v711, %v711
        %v830 = vmul.f32 %v712, %v712
        %v831 = vmul.f32 %v713, %v713
        %v832 = vmul.f32 %v714, %v714
        %v833 = vmul.f32 %v715, %v715
        %v834 = vmul.f32 %v716, %v716
        %v835 = vmul.f32 %v717, %v717
        %v836 = vmul.f32 %v718, %v718
        %v837 = vmul.f32 %v719, %v719
        %v838 = vmul.f32 %v720, %v720
        %v839 = vmul.f32 %v721, %v721
        %v840 = vadd.f32 %v824, %v825
        %v841 = vadd.f32 %v840, %v826
        %v842 = vadd.f32 %v841, %v827
        %v843 = vadd.f32 %v842, %v828
        %v844 = vadd.f32 %v843, %v829
        %v845 = vadd.f32 %v844, %v830
        %v846 = vadd.f32 %v845, %v831
        %v847 = vadd.f32 %v846, %v832
        %v848 = vadd.f32 %v847, %v833
        %v849 = vadd.f32 %v848, %v834
        %v850 = vadd.f32 %v849, %v835
        %v851 = vadd.f32 %v850, %v836
        %v852 = vadd.f32 %v851, %v837
        %v853 = vadd.f32 %v852, %v838
        %v854 = vadd.f32 %v853, %v839
        %v855 = vrot.slane %v854, 4
        %v856 = vadd.f32 %v854, %v855
        %v857 = vrot.slane %v856, 2
        %v858 = vadd.f32 %v856, %v857
        %v859 = vrot.slane %v858, 1
        %v860 = vadd.f32 %v858, %v859
        %861 = vst [vmem:[%s312] sm:$0x1] %v860
      $region36: #{conv_bn.2} parent=27 // pred_fallthru
        _
      %s862 = smul.u32 16, %s21
      %p863 = scmp.lt.s32.totalorder %s862, 63
      %s864 = scalar_select %p863, %s862, 63
      %p865 = scmp.lt.s32.totalorder %s22, 0
      %s866 = scalar_select %p865, %s22, 0
      %s867 = sadd.s32 %s866, %s864
      %s868 = smul.addr %s867, 4
      %s869 = scalar_lea.vmem %s2, %s868
      %p870 = scmp.lt.s32.totalorder %s21, 3
      %s871 = scalar_select %p870, %s21, 3
      %p872 = scmp.lt.s32.totalorder %s22, 0
      %s873 = scalar_select %p872, %s22, 0
      %s874 = sadd.s32 %s873, %s871
      %s875 = scalar_lea.vmem %s3, %s874
      %p876 = scmp.lt.s32.totalorder %s21, 3
      %s877 = scalar_select %p876, %s21, 3
      %p878 = scmp.lt.s32.totalorder %s22, 0
      %s879 = scalar_select %p878, %s22, 0
      %s880 = sadd.s32 %s879, %s877
      %s881 = scalar_lea.vmem %s4, %s880
      // Predicated region
      $region37: #{conv_bn.2} parent=27 // pred_check
        %p882 = pneg %p111
      $region38: #{conv_bn.2} parent=27 // pred_check_branch
        %884 = sbr.rel (%p882) target = $region40
      $region39: #{conv_bn.2} parent=27 // pred_region
        %s885 = smul.u32 16, %s21
      $region40: #{conv_bn.2} parent=27 // pred_fallthru
        _
      // Predicated region
      $region41: #{conv_bn.2} parent=27 // pred_check
        %p886 = pneg %p139
      $region42: #{conv_bn.2} parent=27 // pred_check_branch
        %888 = sbr.rel (%p886) target = $region44
      $region43: #{conv_bn.2} parent=27 // pred_region
        _
      $region44: #{conv_bn.2} parent=27 // pred_fallthru
        _
      // Predicated region
      $region45: #{conv_bn.2} parent=27 // pred_check
        %p889 = pneg %p167
      $region46: #{conv_bn.2} parent=27 // pred_check_branch
        %891 = sbr.rel (%p889) target = $region48
      $region47: #{conv_bn.2} parent=27 // pred_region
        _
      $region48: #{conv_bn.2} parent=27 // pred_fallthru
        _
    $region28: #{conv_bn.2} parent=5 // pred_fallthru
      _
    %p892 = scmp.le.s32.totalorder 2, %s11
    // Predicated region
    $region49: #{conv_bn.2} parent=5 // pred_check
      %p893 = pneg %p892
    $region50: #{conv_bn.2} parent=5 // pred_check_branch
      %895 = sbr.rel (%p893) target = $region52
    $region51: #{conv_bn.2} parent=5 // pred_region
      %s896 = ssub.s32 %s11, 2
      // Predicated region
      $region53: #{conv_bn.2} parent=51 // pred_check
        %p897 = pneg %p117
      $region54: #{conv_bn.2} parent=51 // pred_check_branch
        %899 = sbr.rel (%p897) target = $region56
      $region55: #{conv_bn.2} parent=51 // pred_region
        %s900 = smul.u32 16, %s24
        %p901 = scmp.lt.s32.totalorder %s900, 63
        %s902 = scalar_select %p901, %s900, 63
        %p903 = scmp.lt.s32.totalorder %s25, 0
        %s904 = scalar_select %p903, %s25, 0
        %s905 = sadd.s32 %s904, %s902
        %s906 = smul.addr %s905, 4
        %s907 = scalar_lea.vmem %s2, %s906
      $region56: #{conv_bn.2} parent=51 // pred_fallthru
        _
      // Predicated region
      $region57: #{conv_bn.2} parent=51 // pred_check
        %p908 = pneg %p145
      $region58: #{conv_bn.2} parent=51 // pred_check_branch
        %910 = sbr.rel (%p908) target = $region60
      $region59: #{conv_bn.2} parent=51 // pred_region
        %p911 = scmp.lt.s32.totalorder %s24, 3
        %s912 = scalar_select %p911, %s24, 3
        %p913 = scmp.lt.s32.totalorder %s25, 0
        %s914 = scalar_select %p913, %s25, 0
        %s915 = sadd.s32 %s914, %s912
        %s916 = scalar_lea.vmem %s3, %s915
      $region60: #{conv_bn.2} parent=51 // pred_fallthru
        _
      // Predicated region
      $region61: #{conv_bn.2} parent=51 // pred_check
        %p917 = pneg %p173
      $region62: #{conv_bn.2} parent=51 // pred_check_branch
        %919 = sbr.rel (%p917) target = $region64
      $region63: #{conv_bn.2} parent=51 // pred_region
        %p920 = scmp.lt.s32.totalorder %s24, 3
        %s921 = scalar_select %p920, %s24, 3
        %p922 = scmp.lt.s32.totalorder %s25, 0
        %s923 = scalar_select %p922, %s25, 0
        %s924 = sadd.s32 %s923, %s921
        %s925 = scalar_lea.vmem %s4, %s924
      $region64: #{conv_bn.2} parent=51 // pred_fallthru
        _
    $region52: #{conv_bn.2} parent=5 // pred_fallthru
      _
  $region6: #{conv_bn.2} parent=0 // loop_footer
    %s15 = sadd.s32 1, %s11
  $region7: #{conv_bn.2} parent=0 // loop_footer_branch
    %10 = sbr.rel target = $region3
  $region8: #{conv_bn.2} parent=0 // loop_exit
    _

// kernel: conv_bn.3
$region0: #{conv_bn.3}
  #allocation0 [shape = 'u32[]', space=smem, size = 0x4, offset = 0x4, fixed_abs, tag = 'smem constant byte address 0x4 - core index']
  #allocation1 [shape = 'u32[144,128]{1,0:T(1,128)}', space=vmem, size = 0x12000, scoped, tag = 'internal scratch']
  %s0 = inlined_call_operand.vmem [shape: bf16[512,128], index: 0, kind: input, shape index: {}]
  %s1 = inlined_call_operand.vmem [shape: f32[1,128], index: 1, kind: input, shape index: {}]
  %s2 = inlined_call_operand.vmem [shape: f32[1,128], index: 2, kind: input, shape index: {}]
  %s3 = inlined_call_operand.hbm [shape: bf16[512,128], index: 3, kind: output, shape index: {}]
  %s4 = sld [smem:[#allocation0]]
  $region22: #{conv_bn.3} parent=0
    _
  %s6 = ssub.s32 1, %s4
  %s7 = scalar_select 0, %s6, %s4
  $region1: #{conv_bn.3} parent=0
    #allocation2 [shape = 'u8[131072]{0}', space=vmem, size = 0x20000, scoped, tag = 'output window, operand 0, single buffered']
    #allocation3 [shape = 's32[1]{0}', space=sflag, size = 0x4, scoped, tag = 'scoped memory for conv_bn.3']
    %8 = vsyncpa [#allocation3], 0
    // Predicated region
    $region2: #{conv_bn.3} parent=1 // pred_check
      _
    $region3: #{conv_bn.3} parent=1 // pred_check_branch
      %10 = sbr.rel (0) target = $region5
    $region4: #{conv_bn.3} parent=1 // pred_region
      _
    $region5: #{conv_bn.3} parent=1 // pred_fallthru
      _
    // Predicated region
    $region6: #{conv_bn.3} parent=1 // pred_check
      _
    $region7: #{conv_bn.3} parent=1 // pred_check_branch
      %12 = sbr.rel (0) target = $region9
    $region8: #{conv_bn.3} parent=1 // pred_region
      _
    $region9: #{conv_bn.3} parent=1 // pred_fallthru
      _
    // Predicated region
    $region10: #{conv_bn.3} parent=1 // pred_check
      _
    $region11: #{conv_bn.3} parent=1 // pred_check_branch
      %14 = sbr.rel (0) target = $region13
    $region12: #{conv_bn.3} parent=1 // pred_region
      _
    $region13: #{conv_bn.3} parent=1 // pred_fallthru
      _
    %v15 = vld [vmem:[%s0] sm:$0xf]
    %v16 = vld [vmem:[%s0 + $0x4] sm:$0xf]
    %v17 = vld [vmem:[%s0 + $0x8] sm:$0xf]
    %v18 = vld [vmem:[%s0 + $0xc] sm:$0xf]
    %v19 = vld [vmem:[%s0 + $0x10] sm:$0xf]
    %v20 = vld [vmem:[%s0 + $0x14] sm:$0xf]
    %v21 = vld [vmem:[%s0 + $0x18] sm:$0xf]
    %v22 = vld [vmem:[%s0 + $0x1c] sm:$0xf]
    %v23 = vld [vmem:[%s0 + $0x20] sm:$0xf]
    %v24 = vld [vmem:[%s0 + $0x24] sm:$0xf]
    %v25 = vld [vmem:[%s0 + $0x28] sm:$0xf]
    %v26 = vld [vmem:[%s0 + $0x2c] sm:$0xf]
    %v27 = vld [vmem:[%s0 + $0x30] sm:$0xf]
    %v28 = vld [vmem:[%s0 + $0x34] sm:$0xf]
    %v29 = vld [vmem:[%s0 + $0x38] sm:$0xf]
    %v30 = vld [vmem:[%s0 + $0x3c] sm:$0xf]
    %v31 = vld [vmem:[%s0 + $0x40] sm:$0xf]
    %v32 = vld [vmem:[%s0 + $0x44] sm:$0xf]
    %v33 = vld [vmem:[%s0 + $0x48] sm:$0xf]
    %v34 = vld [vmem:[%s0 + $0x4c] sm:$0xf]
    %v35 = vld [vmem:[%s0 + $0x50] sm:$0xf]
    %v36 = vld [vmem:[%s0 + $0x54] sm:$0xf]
    %v37 = vld [vmem:[%s0 + $0x58] sm:$0xf]
    %v38 = vld [vmem:[%s0 + $0x5c] sm:$0xf]
    %v39 = vld [vmem:[%s0 + $0x60] sm:$0xf]
    %v40 = vld [vmem:[%s0 + $0x64] sm:$0xf]
    %v41 = vld [vmem:[%s0 + $0x68] sm:$0xf]
    %v42 = vld [vmem:[%s0 + $0x6c] sm:$0xf]
    %v43 = vld [vmem:[%s0 + $0x70] sm:$0xf]
    %v44 = vld [vmem:[%s0 + $0x74] sm:$0xf]
    %v45 = vld [vmem:[%s0 + $0x78] sm:$0xf]
    %v46 = vld [vmem:[%s0 + $0x7c] sm:$0xf]
    %v47 = vld [vmem:[%s0 + $0x80] sm:$0xf]
    %v48 = vld [vmem:[%s0 + $0x84] sm:$0xf]
    %v49 = vld [vmem:[%s0 + $0x88] sm:$0xf]
    %v50 = vld [vmem:[%s0 + $0x8c] sm:$0xf]
    %v51 = vld [vmem:[%s0 + $0x90] sm:$0xf]
    %v52 = vld [vmem:[%s0 + $0x94] sm:$0xf]
    %v53 = vld [vmem:[%s0 + $0x98] sm:$0xf]
    %v54 = vld [vmem:[%s0 + $0x9c] sm:$0xf]
    %v55 = vld [vmem:[%s0 + $0xa0] sm:$0xf]
    %v56 = vld [vmem:[%s0 + $0xa4] sm:$0xf]
    %v57 = vld [vmem:[%s0 + $0xa8] sm:$0xf]
    %v58 = vld [vmem:[%s0 + $0xac] sm:$0xf]
    %v59 = vld [vmem:[%s0 + $0xb0] sm:$0xf]
    %v60 = vld [vmem:[%s0 + $0xb4] sm:$0xf]
    %v61 = vld [vmem:[%s0 + $0xb8] sm:$0xf]
    %v62 = vld [vmem:[%s0 + $0xbc] sm:$0xf]
    %v63 = vld [vmem:[%s0 + $0xc0] sm:$0xf]
    %v64 = vld [vmem:[%s0 + $0xc4] sm:$0xf]
    %v65 = vld [vmem:[%s0 + $0xc8] sm:$0xf]
    %v66 = vld [vmem:[%s0 + $0xcc] sm:$0xf]
    %v67 = vld [vmem:[%s0 + $0xd0] sm:$0xf]
    %v68 = vld [vmem:[%s0 + $0xd4] sm:$0xf]
    %v69 = vld [vmem:[%s0 + $0xd8] sm:$0xf]
    %v70 = vld [vmem:[%s0 + $0xdc] sm:$0xf]
    %v71 = vld [vmem:[%s0 + $0xe0] sm:$0xf]
    %v72 = vld [vmem:[%s0 + $0xe4] sm:$0xf]
    %v73 = vld [vmem:[%s0 + $0xe8] sm:$0xf]
    %v74 = vld [vmem:[%s0 + $0xec] sm:$0xf]
    %v75 = vld [vmem:[%s0 + $0xf0] sm:$0xf]
    %v76 = vld [vmem:[%s0 + $0xf4] sm:$0xf]
    %v77 = vld [vmem:[%s0 + $0xf8] sm:$0xf]
    %v78 = vld [vmem:[%s0 + $0xfc] sm:$0xf]
    %v79 = vunpack.c.l.bf16 %v15
    %v80 = vunpack.c.l.bf16 %v16
    %v81 = vunpack.c.l.bf16 %v17
    %v82 = vunpack.c.l.bf16 %v18
    %v83 = vunpack.c.l.bf16 %v19
    %v84 = vunpack.c.l.bf16 %v20
    %v85 = vunpack.c.l.bf16 %v21
    %v86 = vunpack.c.l.bf16 %v22
    %v87 = vunpack.c.l.bf16 %v23
    %v88 = vunpack.c.l.bf16 %v24
    %v89 = vunpack.c.l.bf16 %v25
    %v90 = vunpack.c.l.bf16 %v26
    %v91 = vunpack.c.l.bf16 %v27
    %v92 = vunpack.c.l.bf16 %v28
    %v93 = vunpack.c.l.bf16 %v29
    %v94 = vunpack.c.l.bf16 %v30
    %v95 = vunpack.c.l.bf16 %v31
    %v96 = vunpack.c.l.bf16 %v32
    %v97 = vunpack.c.l.bf16 %v33
    %v98 = vunpack.c.l.bf16 %v34
    %v99 = vunpack.c.l.bf16 %v35
    %v100 = vunpack.c.l.bf16 %v36
    %v101 = vunpack.c.l.bf16 %v37
    %v102 = vunpack.c.l.bf16 %v38
    %v103 = vunpack.c.l.bf16 %v39
    %v104 = vunpack.c.l.bf16 %v40
    %v105 = vunpack.c.l.bf16 %v41
    %v106 = vunpack.c.l.bf16 %v42
    %v107 = vunpack.c.l.bf16 %v43
    %v108 = vunpack.c.l.bf16 %v44
    %v109 = vunpack.c.l.bf16 %v45
    %v110 = vunpack.c.l.bf16 %v46
    %v111 = vunpack.c.l.bf16 %v47
    %v112 = vunpack.c.l.bf16 %v48
    %v113 = vunpack.c.l.bf16 %v49
    %v114 = vunpack.c.l.bf16 %v50
    %v115 = vunpack.c.l.bf16 %v51
    %v116 = vunpack.c.l.bf16 %v52
    %v117 = vunpack.c.l.bf16 %v53
    %v118 = vunpack.c.l.bf16 %v54
    %v119 = vunpack.c.l.bf16 %v55
    %v120 = vunpack.c.l.bf16 %v56
    %v121 = vunpack.c.l.bf16 %v57
    %v122 = vunpack.c.l.bf16 %v58
    %v123 = vunpack.c.l.bf16 %v59
    %v124 = vunpack.c.l.bf16 %v60
    %v125 = vunpack.c.l.bf16 %v61
    %v126 = vunpack.c.l.bf16 %v62
    %v127 = vunpack.c.l.bf16 %v63
    %v128 = vunpack.c.l.bf16 %v64
    %v129 = vunpack.c.l.bf16 %v65
    %v130 = vunpack.c.l.bf16 %v66
    %v131 = vunpack.c.l.bf16 %v67
    %v132 = vunpack.c.l.bf16 %v68
    %v133 = vunpack.c.l.bf16 %v69
    %v134 = vunpack.c.l.bf16 %v70
    %v135 = vunpack.c.l.bf16 %v71
    %v136 = vunpack.c.l.bf16 %v72
    %v137 = vunpack.c.l.bf16 %v73
    %v138 = vunpack.c.l.bf16 %v74
    %v139 = vunpack.c.l.bf16 %v75
    %v140 = vunpack.c.l.bf16 %v76
    %v141 = vunpack.c.l.bf16 %v77
    %v142 = vunpack.c.l.bf16 %v78
    %v143 = vld [vmem:[%s1] sm:$0x1]
    %v145 = vlaneseq
    %v146 = vshrl.u32 %v145, 7
    %v147 = vsub.s32 0, %v146
    %v148 = vrot.slane %v143, %v147
    %v150 = vmul.f32 %v79, %v148
    %v151 = vmul.f32 %v80, %v148
    %v152 = vmul.f32 %v81, %v148
    %v153 = vmul.f32 %v82, %v148
    %v154 = vmul.f32 %v83, %v148
    %v155 = vmul.f32 %v84, %v148
    %v156 = vmul.f32 %v85, %v148
    %v157 = vmul.f32 %v86, %v148
    %v158 = vmul.f32 %v87, %v148
    %v159 = vmul.f32 %v88, %v148
    %v160 = vmul.f32 %v89, %v148
    %v161 = vmul.f32 %v90, %v148
    %v162 = vmul.f32 %v91, %v148
    %v163 = vmul.f32 %v92, %v148
    %v164 = vmul.f32 %v93, %v148
    %v165 = vmul.f32 %v94, %v148
    %v166 = vmul.f32 %v95, %v148
    %v167 = vmul.f32 %v96, %v148
    %v168 = vmul.f32 %v97, %v148
    %v169 = vmul.f32 %v98, %v148
    %v170 = vmul.f32 %v99, %v148
    %v171 = vmul.f32 %v100, %v148
    %v172 = vmul.f32 %v101, %v148
    %v173 = vmul.f32 %v102, %v148
    %v174 = vmul.f32 %v103, %v148
    %v175 = vmul.f32 %v104, %v148
    %v176 = vmul.f32 %v105, %v148
    %v177 = vmul.f32 %v106, %v148
    %v178 = vmul.f32 %v107, %v148
    %v179 = vmul.f32 %v108, %v148
    %v180 = vmul.f32 %v109, %v148
    %v181 = vmul.f32 %v110, %v148
    %v182 = vmul.f32 %v111, %v148
    %v183 = vmul.f32 %v112, %v148
    %v184 = vmul.f32 %v113, %v148
    %v185 = vmul.f32 %v114, %v148
    %v186 = vmul.f32 %v115, %v148
    %v187 = vmul.f32 %v116, %v148
    %v188 = vmul.f32 %v117, %v148
    %v189 = vmul.f32 %v118, %v148
    %v190 = vmul.f32 %v119, %v148
    %v191 = vmul.f32 %v120, %v148
    %v192 = vmul.f32 %v121, %v148
    %v193 = vmul.f32 %v122, %v148
    %v194 = vmul.f32 %v123, %v148
    %v195 = vmul.f32 %v124, %v148
    %v196 = vmul.f32 %v125, %v148
    %v197 = vmul.f32 %v126, %v148
    %v198 = vmul.f32 %v127, %v148
    %v199 = vmul.f32 %v128, %v148
    %v200 = vmul.f32 %v129, %v148
    %v201 = vmul.f32 %v130, %v148
    %v202 = vmul.f32 %v131, %v148
    %v203 = vmul.f32 %v132, %v148
    %v204 = vmul.f32 %v133, %v148
    %v205 = vmul.f32 %v134, %v148
    %v206 = vmul.f32 %v135, %v148
    %v207 = vmul.f32 %v136, %v148
    %v208 = vmul.f32 %v137, %v148
    %v209 = vmul.f32 %v138, %v148
    %v210 = vmul.f32 %v139, %v148
    %v211 = vmul.f32 %v140, %v148
    %v212 = vmul.f32 %v141, %v148
    %v213 = vmul.f32 %v142, %v148
    %v214 = vld [vmem:[%s2] sm:$0x1]
    %v216 = vlaneseq
    %v217 = vshrl.u32 %v216, 7
    %v218 = vsub.s32 0, %v217
    %v219 = vrot.slane %v214, %v218
    %v221 = vadd.f32 %v150, %v219
    %v222 = vadd.f32 %v151, %v219
    %v223 = vadd.f32 %v152, %v219
    %v224 = vadd.f32 %v153, %v219
    %v225 = vadd.f32 %v154, %v219
    %v226 = vadd.f32 %v155, %v219
    %v227 = vadd.f32 %v156, %v219
    %v228 = vadd.f32 %v157, %v219
    %v229 = vadd.f32 %v158, %v219
    %v230 = vadd.f32 %v159, %v219
    %v231 = vadd.f32 %v160, %v219
    %v232 = vadd.f32 %v161, %v219
    %v233 = vadd.f32 %v162, %v219
    %v234 = vadd.f32 %v163, %v219
    %v235 = vadd.f32 %v164, %v219
    %v236 = vadd.f32 %v165, %v219
    %v237 = vadd.f32 %v166, %v219
    %v238 = vadd.f32 %v167, %v219
    %v239 = vadd.f32 %v168, %v219
    %v240 = vadd.f32 %v169, %v219
    %v241 = vadd.f32 %v170, %v219
    %v242 = vadd.f32 %v171, %v219
    %v243 = vadd.f32 %v172, %v219
    %v244 = vadd.f32 %v173, %v219
    %v245 = vadd.f32 %v174, %v219
    %v246 = vadd.f32 %v175, %v219
    %v247 = vadd.f32 %v176, %v219
    %v248 = vadd.f32 %v177, %v219
    %v249 = vadd.f32 %v178, %v219
    %v250 = vadd.f32 %v179, %v219
    %v251 = vadd.f32 %v180, %v219
    %v252 = vadd.f32 %v181, %v219
    %v253 = vadd.f32 %v182, %v219
    %v254 = vadd.f32 %v183, %v219
    %v255 = vadd.f32 %v184, %v219
    %v256 = vadd.f32 %v185, %v219
    %v257 = vadd.f32 %v186, %v219
    %v258 = vadd.f32 %v187, %v219
    %v259 = vadd.f32 %v188, %v219
    %v260 = vadd.f32 %v189, %v219
    %v261 = vadd.f32 %v190, %v219
    %v262 = vadd.f32 %v191, %v219
    %v263 = vadd.f32 %v192, %v219
    %v264 = vadd.f32 %v193, %v219
    %v265 = vadd.f32 %v194, %v219
    %v266 = vadd.f32 %v195, %v219
    %v267 = vadd.f32 %v196, %v219
    %v268 = vadd.f32 %v197, %v219
    %v269 = vadd.f32 %v198, %v219
    %v270 = vadd.f32 %v199, %v219
    %v271 = vadd.f32 %v200, %v219
    %v272 = vadd.f32 %v201, %v219
    %v273 = vadd.f32 %v202, %v219
    %v274 = vadd.f32 %v203, %v219
    %v275 = vadd.f32 %v204, %v219
    %v276 = vadd.f32 %v205, %v219
    %v277 = vadd.f32 %v206, %v219
    %v278 = vadd.f32 %v207, %v219
    %v279 = vadd.f32 %v208, %v219
    %v280 = vadd.f32 %v209, %v219
    %v281 = vadd.f32 %v210, %v219
    %v282 = vadd.f32 %v211, %v219
    %v283 = vadd.f32 %v212, %v219
    %v284 = vadd.f32 %v213, %v219
    %v285 = vpack.c.bf16 %v222, %v221
    %v286 = vpack.c.bf16 %v224, %v223
    %v287 = vpack.c.bf16 %v226, %v225
    %v288 = vpack.c.bf16 %v228, %v227
    %v289 = vpack.c.bf16 %v230, %v229
    %v290 = vpack.c.bf16 %v232, %v231
    %v291 = vpack.c.bf16 %v234, %v233
    %v292 = vpack.c.bf16 %v236, %v235
    %v293 = vpack.c.bf16 %v238, %v237
    %v294 = vpack.c.bf16 %v240, %v239
    %v295 = vpack.c.bf16 %v242, %v241
    %v296 = vpack.c.bf16 %v244, %v243
    %v297 = vpack.c.bf16 %v246, %v245
    %v298 = vpack.c.bf16 %v248, %v247
    %v299 = vpack.c.bf16 %v250, %v249
    %v300 = vpack.c.bf16 %v252, %v251
    %v301 = vpack.c.bf16 %v254, %v253
    %v302 = vpack.c.bf16 %v256, %v255
    %v303 = vpack.c.bf16 %v258, %v257
    %v304 = vpack.c.bf16 %v260, %v259
    %v305 = vpack.c.bf16 %v262, %v261
    %v306 = vpack.c.bf16 %v264, %v263
    %v307 = vpack.c.bf16 %v266, %v265
    %v308 = vpack.c.bf16 %v268, %v267
    %v309 = vpack.c.bf16 %v270, %v269
    %v310 = vpack.c.bf16 %v272, %v271
    %v311 = vpack.c.bf16 %v274, %v273
    %v312 = vpack.c.bf16 %v276, %v275
    %v313 = vpack.c.bf16 %v278, %v277
    %v314 = vpack.c.bf16 %v280, %v279
    %v315 = vpack.c.bf16 %v282, %v281
    %v316 = vpack.c.bf16 %v284, %v283
    %v349 = vunpack.c.l.b16 %v285
    %v350 = vunpack.c.h.b16 %v285
    %v351 = vunpack.c.l.b16 %v286
    %v352 = vunpack.c.h.b16 %v286
    %v353 = vunpack.c.l.b16 %v287
    %v354 = vunpack.c.h.b16 %v287
    %v355 = vunpack.c.l.b16 %v288
    %v356 = vunpack.c.h.b16 %v288
    %v357 = vunpack.c.l.b16 %v289
    %v358 = vunpack.c.h.b16 %v289
    %v359 = vunpack.c.l.b16 %v290
    %v360 = vunpack.c.h.b16 %v290
    %v361 = vunpack.c.l.b16 %v291
    %v362 = vunpack.c.h.b16 %v291
    %v363 = vunpack.c.l.b16 %v292
    %v364 = vunpack.c.h.b16 %v292
    %v365 = vunpack.c.l.b16 %v293
    %v366 = vunpack.c.h.b16 %v293
    %v367 = vunpack.c.l.b16 %v294
    %v368 = vunpack.c.h.b16 %v294
    %v369 = vunpack.c.l.b16 %v295
    %v370 = vunpack.c.h.b16 %v295
    %v371 = vunpack.c.l.b16 %v296
    %v372 = vunpack.c.h.b16 %v296
    %v373 = vunpack.c.l.b16 %v297
    %v374 = vunpack.c.h.b16 %v297
    %v375 = vunpack.c.l.b16 %v298
    %v376 = vunpack.c.h.b16 %v298
    %v377 = vunpack.c.l.b16 %v299
    %v378 = vunpack.c.h.b16 %v299
    %v379 = vunpack.c.l.b16 %v300
    %v380 = vunpack.c.h.b16 %v300
    %v381 = vunpack.c.l.b16 %v301
    %v382 = vunpack.c.h.b16 %v301
    %v383 = vunpack.c.l.b16 %v302
    %v384 = vunpack.c.h.b16 %v302
    %v385 = vunpack.c.l.b16 %v303
    %v386 = vunpack.c.h.b16 %v303
    %v387 = vunpack.c.l.b16 %v304
    %v388 = vunpack.c.h.b16 %v304
    %v389 = vunpack.c.l.b16 %v305
    %v390 = vunpack.c.h.b16 %v305
    %v391 = vunpack.c.l.b16 %v306
    %v392 = vunpack.c.h.b16 %v306
    %v393 = vunpack.c.l.b16 %v307
    %v394 = vunpack.c.h.b16 %v307
    %v395 = vunpack.c.l.b16 %v308
    %v396 = vunpack.c.h.b16 %v308
    %v397 = vunpack.c.l.b16 %v309
    %v398 = vunpack.c.h.b16 %v309
    %v399 = vunpack.c.l.b16 %v310
    %v400 = vunpack.c.h.b16 %v310
    %v401 = vunpack.c.l.b16 %v311
    %v402 = vunpack.c.h.b16 %v311
    %v403 = vunpack.c.l.b16 %v312
    %v404 = vunpack.c.h.b16 %v312
    %v405 = vunpack.c.l.b16 %v313
    %v406 = vunpack.c.h.b16 %v313
    %v407 = vunpack.c.l.b16 %v314
    %v408 = vunpack.c.h.b16 %v314
    %v409 = vunpack.c.l.b16 %v315
    %v410 = vunpack.c.h.b16 %v315
    %v411 = vunpack.c.l.b16 %v316
    %v412 = vunpack.c.h.b16 %v316
    %v413 = vpack.c.b16 %v349, %v349
    %v414 = vpack.c.b16 %v350, %v350
    %v415 = vpack.c.b16 %v351, %v351
    %v416 = vpack.c.b16 %v352, %v352
    %v417 = vpack.c.b16 %v353, %v353
    %v418 = vpack.c.b16 %v354, %v354
    %v419 = vpack.c.b16 %v355, %v355
    %v420 = vpack.c.b16 %v356, %v356
    %v421 = vpack.c.b16 %v357, %v357
    %v422 = vpack.c.b16 %v358, %v358
    %v423 = vpack.c.b16 %v359, %v359
    %v424 = vpack.c.b16 %v360, %v360
    %v425 = vpack.c.b16 %v361, %v361
    %v426 = vpack.c.b16 %v362, %v362
    %v427 = vpack.c.b16 %v363, %v363
    %v428 = vpack.c.b16 %v364, %v364
    %v429 = vpack.c.b16 %v365, %v365
    %v430 = vpack.c.b16 %v366, %v366
    %v431 = vpack.c.b16 %v367, %v367
    %v432 = vpack.c.b16 %v368, %v368
    %v433 = vpack.c.b16 %v369, %v369
    %v434 = vpack.c.b16 %v370, %v370
    %v435 = vpack.c.b16 %v371, %v371
    %v436 = vpack.c.b16 %v372, %v372
    %v437 = vpack.c.b16 %v373, %v373
    %v438 = vpack.c.b16 %v374, %v374
    %v439 = vpack.c.b16 %v375, %v375
    %v440 = vpack.c.b16 %v376, %v376
    %v441 = vpack.c.b16 %v377, %v377
    %v442 = vpack.c.b16 %v378, %v378
    %v443 = vpack.c.b16 %v379, %v379
    %v444 = vpack.c.b16 %v380, %v380
    %v445 = vpack.c.b16 %v381, %v381
    %v446 = vpack.c.b16 %v382, %v382
    %v447 = vpack.c.b16 %v383, %v383
    %v448 = vpack.c.b16 %v384, %v384
    %v449 = vpack.c.b16 %v385, %v385
    %v450 = vpack.c.b16 %v386, %v386
    %v451 = vpack.c.b16 %v387, %v387
    %v452 = vpack.c.b16 %v388, %v388
    %v453 = vpack.c.b16 %v389, %v389
    %v454 = vpack.c.b16 %v390, %v390
    %v455 = vpack.c.b16 %v391, %v391
    %v456 = vpack.c.b16 %v392, %v392
    %v457 = vpack.c.b16 %v393, %v393
    %v458 = vpack.c.b16 %v394, %v394
    %v459 = vpack.c.b16 %v395, %v395
    %v460 = vpack.c.b16 %v396, %v396
    %v461 = vpack.c.b16 %v397, %v397
    %v462 = vpack.c.b16 %v398, %v398
    %v463 = vpack.c.b16 %v399, %v399
    %v464 = vpack.c.b16 %v400, %v400
    %v465 = vpack.c.b16 %v401, %v401
    %v466 = vpack.c.b16 %v402, %v402
    %v467 = vpack.c.b16 %v403, %v403
    %v468 = vpack.c.b16 %v404, %v404
    %v469 = vpack.c.b16 %v405, %v405
    %v470 = vpack.c.b16 %v406, %v406
    %v471 = vpack.c.b16 %v407, %v407
    %v472 = vpack.c.b16 %v408, %v408
    %v473 = vpack.c.b16 %v409, %v409
    %v474 = vpack.c.b16 %v410, %v410
    %v475 = vpack.c.b16 %v411, %v411
    %v476 = vpack.c.b16 %v412, %v412
    %541 = vst [vmem:[#allocation2] sm:$0xf] %v413
    %542 = vst [vmem:[#allocation2 + $0x4] sm:$0xf] %v414
    %543 = vst [vmem:[#allocation2 + $0x8] sm:$0xf] %v415
    %544 = vst [vmem:[#allocation2 + $0xc] sm:$0xf] %v416
    %545 = vst [vmem:[#allocation2 + $0x10] sm:$0xf] %v417
    %546 = vst [vmem:[#allocation2 + $0x14] sm:$0xf] %v418
    %547 = vst [vmem:[#allocation2 + $0x18] sm:$0xf] %v419
    %548 = vst [vmem:[#allocation2 + $0x1c] sm:$0xf] %v420
    %549 = vst [vmem:[#allocation2 + $0x20] sm:$0xf] %v421
    %550 = vst [vmem:[#allocation2 + $0x24] sm:$0xf] %v422
    %551 = vst [vmem:[#allocation2 + $0x28] sm:$0xf] %v423
    %552 = vst [vmem:[#allocation2 + $0x2c] sm:$0xf] %v424
    %553 = vst [vmem:[#allocation2 + $0x30] sm:$0xf] %v425
    %554 = vst [vmem:[#allocation2 + $0x34] sm:$0xf] %v426
    %555 = vst [vmem:[#allocation2 + $0x38] sm:$0xf] %v427
    %556 = vst [vmem:[#allocation2 + $0x3c] sm:$0xf] %v428
    %557 = vst [vmem:[#allocation2 + $0x40] sm:$0xf] %v429
    %558 = vst [vmem:[#allocation2 + $0x44] sm:$0xf] %v430
    %559 = vst [vmem:[#allocation2 + $0x48] sm:$0xf] %v431
    %560 = vst [vmem:[#allocation2 + $0x4c] sm:$0xf] %v432
    %561 = vst [vmem:[#allocation2 + $0x50] sm:$0xf] %v433
    %562 = vst [vmem:[#allocation2 + $0x54] sm:$0xf] %v434
    %563 = vst [vmem:[#allocation2 + $0x58] sm:$0xf] %v435
    %564 = vst [vmem:[#allocation2 + $0x5c] sm:$0xf] %v436
    %565 = vst [vmem:[#allocation2 + $0x60] sm:$0xf] %v437
    %566 = vst [vmem:[#allocation2 + $0x64] sm:$0xf] %v438
    %567 = vst [vmem:[#allocation2 + $0x68] sm:$0xf] %v439
    %568 = vst [vmem:[#allocation2 + $0x6c] sm:$0xf] %v440
    %569 = vst [vmem:[#allocation2 + $0x70] sm:$0xf] %v441
    %570 = vst [vmem:[#allocation2 + $0x74] sm:$0xf] %v442
    %571 = vst [vmem:[#allocation2 + $0x78] sm:$0xf] %v443
    %572 = vst [vmem:[#allocation2 + $0x7c] sm:$0xf] %v444
    %573 = vst [vmem:[#allocation2 + $0x80] sm:$0xf] %v445
    %574 = vst [vmem:[#allocation2 + $0x84] sm:$0xf] %v446
    %575 = vst [vmem:[#allocation2 + $0x88] sm:$0xf] %v447
    %576 = vst [vmem:[#allocation2 + $0x8c] sm:$0xf] %v448
    %577 = vst [vmem:[#allocation2 + $0x90] sm:$0xf] %v449
    %578 = vst [vmem:[#allocation2 + $0x94] sm:$0xf] %v450
    %579 = vst [vmem:[#allocation2 + $0x98] sm:$0xf] %v451
    %580 = vst [vmem:[#allocation2 + $0x9c] sm:$0xf] %v452
    %581 = vst [vmem:[#allocation2 + $0xa0] sm:$0xf] %v453
    %582 = vst [vmem:[#allocation2 + $0xa4] sm:$0xf] %v454
    %583 = vst [vmem:[#allocation2 + $0xa8] sm:$0xf] %v455
    %584 = vst [vmem:[#allocation2 + $0xac] sm:$0xf] %v456
    %585 = vst [vmem:[#allocation2 + $0xb0] sm:$0xf] %v457
    %586 = vst [vmem:[#allocation2 + $0xb4] sm:$0xf] %v458
    %587 = vst [vmem:[#allocation2 + $0xb8] sm:$0xf] %v459
    %588 = vst [vmem:[#allocation2 + $0xbc] sm:$0xf] %v460
    %589 = vst [vmem:[#allocation2 + $0xc0] sm:$0xf] %v461
    %590 = vst [vmem:[#allocation2 + $0xc4] sm:$0xf] %v462
    %591 = vst [vmem:[#allocation2 + $0xc8] sm:$0xf] %v463
    %592 = vst [vmem:[#allocation2 + $0xcc] sm:$0xf] %v464
    %593 = vst [vmem:[#allocation2 + $0xd0] sm:$0xf] %v465
    %594 = vst [vmem:[#allocation2 + $0xd4] sm:$0xf] %v466
    %595 = vst [vmem:[#allocation2 + $0xd8] sm:$0xf] %v467
    %596 = vst [vmem:[#allocation2 + $0xdc] sm:$0xf] %v468
    %597 = vst [vmem:[#allocation2 + $0xe0] sm:$0xf] %v469
    %598 = vst [vmem:[#allocation2 + $0xe4] sm:$0xf] %v470
    %599 = vst [vmem:[#allocation2 + $0xe8] sm:$0xf] %v471
    %600 = vst [vmem:[#allocation2 + $0xec] sm:$0xf] %v472
    %601 = vst [vmem:[#allocation2 + $0xf0] sm:$0xf] %v473
    %602 = vst [vmem:[#allocation2 + $0xf4] sm:$0xf] %v474
    %603 = vst [vmem:[#allocation2 + $0xf8] sm:$0xf] %v475
    %604 = vst [vmem:[#allocation2 + $0xfc] sm:$0xf] %v476
    // Predicated region
    $region14: #{conv_bn.3} parent=1 // pred_check
      _
    $region15: #{conv_bn.3} parent=1 // pred_check_branch
      %606 = sbr.rel (0) target = $region17
    $region16: #{conv_bn.3} parent=1 // pred_region
      %s608 = ssub.s32 4096, 4096
      %609 = vsyncadd [#allocation3], %s608
      %s610 = sshll.u32 [#allocation2], 4
      %s611 = int_to_ptr.vmem [resolvable:$true] %s610
      %616 = dma.vmem_to_hbm [thread:$0]  %s611, 4096, %s3, [#allocation3], 64, 64, 4
    $region17: #{conv_bn.3} parent=1 // pred_fallthru
      _
    // Predicated region
    $region18: #{conv_bn.3} parent=1 // pred_check
      _
    $region19: #{conv_bn.3} parent=1 // pred_check_branch
      %618 = sbr.rel (0) target = $region21
    $region20: #{conv_bn.3} parent=1 // pred_region
      %619 = dma.done [#allocation3], 4096
    $region21: #{conv_bn.3} parent=1 // pred_fallthru
      _
    %620 = vsyncpa [#allocation3], 1

</llo_original>
